<compile_context>
chip_gen: v5e
topology: v5e:2x2
jax: 0.10.0
libtpu: 0.0.40
codegen_flags: <defaults>
</compile_context>

<pallas_src>
import functools

import jax
import jax.numpy as jnp
from jax.experimental import pallas as pl
from jax.experimental.pallas import tpu as pltpu


def _round_up(n, m):
    return ((n + m - 1) // m) * m


def _mogp_forward_kernel(x_ref, w_ref, obs_ref, y_ref, sim_ref=None, *,
                         batch, tile_b, mask_tail):
    """One batch tile of the MOGP forward pass.

    x_ref   : [TB, P]     parameter batch tile
    w_ref   : [P,  S]     synthetic simulator weights (VMEM-resident)
    obs_ref : [T,  S]     per-task observed summaries (VMEM-resident)
    y_ref   : [TB, YPAD]  lane-padded negated discrepancies (cols >= T are 0)
    sim_ref : [TB, S]     simulator ("Sim" node) output (optional)
    """
    x = x_ref[...]                          # [TB, P]  f32
    w = w_ref[...]                          # [P,  S]
    obs = obs_ref[...]                      # [T,  S]
    TB = x.shape[0]
    T, S = obs.shape
    YPAD = y_ref.shape[-1]                  # lane-padded task dim (>= 128)

    if mask_tail:
        # Zero rows past the end of the batch so sqrt/sum never touch the
        # uninitialized VMEM in the padded part of the last tile (the stores
        # are masked anyway; this keeps NaN-checking / interpret modes clean).
        row = jax.lax.broadcasted_iota(jnp.int32, x.shape, 0)
        valid = batch - pl.program_id(0) * tile_b
        x = jnp.where(row < valid, x, 0.0)

    # --- Simulator ("Sim" node): sim = x @ W on the MXU --------------------
    sim = jnp.dot(x, w, preferred_element_type=jnp.float32,
                  precision=jax.lax.Precision.HIGHEST)            # [TB, S]

    # --- Per-task discrepancy, reduced AND lane-placed on the MXU ----------
    #   E_t[s, l] = 1.0 if l == t else 0.0            (S x YPAD, one-hot cols)
    #   d2[:, t]  = sum_s diff_t[:, s]^2  ==  ((diff_t * diff_t) @ E_t)[:, t]
    # Task columns are disjoint, so accumulating the T matmuls yields a
    # lane-dense [TB, YPAD] result directly: no jnp.concatenate, no XLU
    # minor-dim reductions; padded lanes stay exactly 0.
    lane = jax.lax.broadcasted_iota(jnp.int32, (S, YPAD), 1)
    d2 = jnp.zeros((TB, YPAD), jnp.float32)
    for t in range(T):                                            # static unroll, T small
        diff = sim - obs[t:t + 1, :]                              # [TB, S]
        sel = (lane == t).astype(jnp.float32)                     # [S, YPAD]
        d2 = d2 + jnp.dot(diff * diff, sel,
                          preferred_element_type=jnp.float32,
                          precision=jax.lax.Precision.HIGHEST)

    # maximize=False  =>  y = -||sim - obs_t||_2.  sqrt over padded lanes is
    # free (EUP slot; sqrt(0) = 0); single unmasked lane-dense store.
    y_ref[...] = -jnp.sqrt(d2)

    if sim_ref is not None:
        sim_ref[...] = sim.astype(sim_ref.dtype)


@functools.partial(jax.jit, static_argnames=("tile_b", "return_sim"))
def mogp_forward(x, w, observed, *, tile_b=1024, return_sim=True):
    """Pallas-backed equivalent of MOGPProblem._forward (maximize=False).

    x        : [B, P] f32   parameter batch
    w        : [P, S] f32   synthetic simulator weights
    observed : [T, S] f32   one observed summary per task
    returns  : (y [B, T], sim [B, S] or None)
    """
    B, P = x.shape
    T, S = observed.shape
    assert w.shape == (P, S)

    YPAD = _round_up(T, 128)                # lane-dense y block (T=4 -> 128)

    # Batch tile: always a multiple of 8 (sublane); capped at ceil(B/2) so the
    # grid has >= 2 steps whenever B > 8, letting ("parallel",) shard the
    # batch axis across v7x's two TensorCores (no effect on v5e/v6e).
    half = _round_up(pl.cdiv(B, 2), 8)
    tb = max(8, _round_up(min(tile_b, half), 8))
    grid = (pl.cdiv(B, tb),)
    mask_tail = (B % tb) != 0

    # VMEM accounting with real lane padding (x's P and y's T pad to 128 lanes
    # in VMEM); pipeline double-buffers every block.
    lp = lambda n: _round_up(n, 128)
    sp = lambda n: _round_up(n, 8)
    block_elems = tb * lp(P) + tb * YPAD + sp(P) * lp(S) + sp(T) * lp(S)
    if return_sim:
        block_elems += tb * lp(S)
    vmem_bytes = 2 * 4 * block_elems        # double-buffered f32
    assert vmem_bytes <= (40 << 20), (
        f"tile_b={tb} needs ~{vmem_bytes >> 20} MiB of VMEM blocks; "
        "reduce tile_b to fit v7x's 64 MiB VMEM.")
    vmem_limit = int(min(max(vmem_bytes + (4 << 20), 16 << 20), 48 << 20))

    cost = pl.CostEstimate(
        flops=2 * B * P * S + 2 * B * T * S + 2 * B * S * YPAD * T,
        transcendentals=B * YPAD,
        bytes_accessed=4 * (B * P + P * S + T * S + B * YPAD
                            + (B * S if return_sim else 0)),
    )

    kernel = functools.partial(_mogp_forward_kernel, batch=B, tile_b=tb,
                               mask_tail=mask_tail)

    in_specs = [
        pl.BlockSpec((tb, P), lambda i: (i, 0)),    # x: tiled over batch
        pl.BlockSpec((P, S), lambda i: (0, 0)),     # W: VMEM-resident
        pl.BlockSpec((T, S), lambda i: (0, 0)),     # observed: VMEM-resident
    ]
    y_spec = pl.BlockSpec((tb, YPAD), lambda i: (i, 0))
    if return_sim:
        out_shape = (jax.ShapeDtypeStruct((B, YPAD), jnp.float32),
                     jax.ShapeDtypeStruct((B, S), jnp.float32))
        out_specs = (y_spec, pl.BlockSpec((tb, S), lambda i: (i, 0)))
    else:
        out_shape = jax.ShapeDtypeStruct((B, YPAD), jnp.float32)
        out_specs = y_spec

    result = pl.pallas_call(
        kernel,
        out_shape=out_shape,
        grid=grid,
        in_specs=in_specs,
        out_specs=out_specs,
        compiler_params=pltpu.CompilerParams(
            dimension_semantics=("parallel",),
            vmem_limit_bytes=vmem_limit,
        ),
        cost_estimate=cost,
    )(x, w, observed)

    if return_sim:
        y_pad, sim = result
    else:
        y_pad, sim = result, None
    return y_pad[:, :T], sim


def mogp_forward_ref(x, w, observed):
    """Plain-JAX reference for the same computation."""
    sim = jnp.dot(x, w, precision=jax.lax.Precision.HIGHEST)
    d = jnp.sqrt(jnp.sum((sim[:, None, :] - observed[None, :, :]) ** 2, axis=-1))
    return -d, sim


if __name__ == "__main__":
    # Shapes consistent with the module:
    #   batch (num_evidence) = 8, param_dim = 8, sim_dim = 128, num_tasks = 4
    B, P, S, T = 8, 8, 128, 4

    key = jax.random.PRNGKey(0)
    kx, kw, kobs, kx2 = jax.random.split(key, 4)

    x = jax.random.uniform(kx, (B, P), dtype=jnp.float32)           # parameter batch
    w = jax.random.normal(kw, (P, S), dtype=jnp.float32) * 0.5      # synthetic simulator
    observed = jax.random.normal(kobs, (T, S), dtype=jnp.float32)   # per-task observed data

    # Module attributes not on the hot path (kept for fidelity, unused in compute):
    ref_point = -5.0 * jnp.ones((T,), dtype=jnp.float32)
    bounds = jnp.stack([jnp.zeros((P,)), jnp.ones((P,))], axis=0)   # [2, param_dim]
    # TODO(synk): process.step() / task-counter bookkeeping has no tensor
    # semantics; the task index simply selects a row of `observed` here.

    # Module-native small batch (single grid step; overhead-dominated by design).
    y, sim = mogp_forward(x, w, observed)
    jax.block_until_ready((y, sim))
    y_ref, sim_ref = mogp_forward_ref(x, w, observed)
    assert y.shape == (B, T) and sim.shape == (B, S)
    assert jnp.allclose(y, y_ref, atol=1e-3, rtol=1e-3)
    assert jnp.allclose(sim, sim_ref, atol=1e-3, rtol=1e-3)

    # Larger batch: multi-step grid (both v7x TCs get work), partial final
    # tile (masked tail rows), y-only fast path (no sim writeback).
    B2 = 300
    x2 = jax.random.uniform(kx2, (B2, P), dtype=jnp.float32)
    y2, sim2 = mogp_forward(x2, w, observed, tile_b=128, return_sim=False)
    jax.block_until_ready(y2)
    y2_ref, _ = mogp_forward_ref(x2, w, observed)
    assert sim2 is None and y2.shape == (B2, T)
    assert jnp.allclose(y2, y2_ref, atol=1e-3, rtol=1e-3)

    print("KERNEL_OK")
</pallas_src>

<mosaic_0001>
module attributes {stable_mosaic.version = 11 : i64} {
  func.func @_mogp_forward_kernel(%arg0: i32, %arg1: memref<8x8xf32, #tpu.memory_space<vmem>>, %arg2: memref<8x128xf32, #tpu.memory_space<vmem>>, %arg3: memref<4x128xf32, #tpu.memory_space<vmem>>, %arg4: memref<8x128xf32, #tpu.memory_space<vmem>>, %arg5: memref<8x128xf32, #tpu.memory_space<vmem>>) attributes {dimension_semantics = [#tpu.dimension_semantics<parallel>], iteration_bounds = array<i64: 1>, scalar_prefetch = 0 : i64, scratch_operands = 0 : i64, tpu.core_type = #tpu.core_type<tc>, window_params = [{transform_indices = @transform_0, window_bounds = array<i64: 8, 8>}, {pipeline_mode = #tpu.pipeline_mode<synchronous>, transform_indices = @transform_1, window_bounds = array<i64: 8, 128>}, {pipeline_mode = #tpu.pipeline_mode<synchronous>, transform_indices = @transform_2, window_bounds = array<i64: 4, 128>}, {transform_indices = @transform_3, window_bounds = array<i64: 8, 128>}, {transform_indices = @transform_4, window_bounds = array<i64: 8, 128>}]} {
    %c0 = arith.constant 0 : index
    %c0_0 = arith.constant 0 : index
    %0 = vector.load %arg1[%c0, %c0_0] : memref<8x8xf32, #tpu.memory_space<vmem>>, vector<8x8xf32>
    %c0_1 = arith.constant 0 : index
    %c0_2 = arith.constant 0 : index
    %1 = vector.load %arg2[%c0_1, %c0_2] : memref<8x128xf32, #tpu.memory_space<vmem>>, vector<8x128xf32>
    %c0_3 = arith.constant 0 : index
    %c0_4 = arith.constant 0 : index
    %2 = vector.load %arg3[%c0_3, %c0_4] : memref<4x128xf32, #tpu.memory_space<vmem>>, vector<4x128xf32>
    %cst = arith.constant dense<0.000000e+00> : vector<8x128xf32>
    %3 = tpu.matmul %0, %1, %cst {dimension_numbers = #tpu.dot_dimension_numbers<[1], [0], [0], [1], [0, 0, 1, 1], [], []>, precision = #tpu.contract_precision<fp32>} : vector<8x8xf32>, vector<8x128xf32>, vector<8x128xf32> -> vector<8x128xf32>
    %4 = tpu.iota {dimensions = array<i32: 1>} : vector<128x128xi32>
    %cst_5 = arith.constant 0.000000e+00 : f32
    %5 = vector.broadcast %cst_5 : f32 to vector<8x128xf32>
    %6 = vector.extract_strided_slice %2 {offsets = [0, 0], sizes = [1, 128], strides = [1, 1]} : vector<4x128xf32> to vector<1x128xf32>
    %7 = vector.broadcast %6 : vector<1x128xf32> to vector<8x128xf32>
    %8 = arith.subf %3, %7 : vector<8x128xf32>
    %c0_i32 = arith.constant 0 : i32
    %9 = vector.broadcast %c0_i32 : i32 to vector<128x128xi32>
    %10 = arith.cmpi eq, %4, %9 : vector<128x128xi32>
    %11 = arith.extui %10 : vector<128x128xi1> to vector<128x128xi32>
    %12 = arith.sitofp %11 : vector<128x128xi32> to vector<128x128xf32>
    %13 = arith.mulf %8, %8 : vector<8x128xf32>
    %cst_6 = arith.constant dense<0.000000e+00> : vector<8x128xf32>
    %14 = tpu.matmul %13, %12, %cst_6 {dimension_numbers = #tpu.dot_dimension_numbers<[1], [0], [0], [1], [0, 0, 1, 1], [], []>, precision = #tpu.contract_precision<fp32>} : vector<8x128xf32>, vector<128x128xf32>, vector<8x128xf32> -> vector<8x128xf32>
    %15 = arith.addf %5, %14 : vector<8x128xf32>
    %16 = vector.extract_strided_slice %2 {offsets = [1, 0], sizes = [1, 128], strides = [1, 1]} : vector<4x128xf32> to vector<1x128xf32>
    %17 = vector.broadcast %16 : vector<1x128xf32> to vector<8x128xf32>
    %18 = arith.subf %3, %17 : vector<8x128xf32>
    %c1_i32 = arith.constant 1 : i32
    %19 = vector.broadcast %c1_i32 : i32 to vector<128x128xi32>
    %20 = arith.cmpi eq, %4, %19 : vector<128x128xi32>
    %21 = arith.extui %20 : vector<128x128xi1> to vector<128x128xi32>
    %22 = arith.sitofp %21 : vector<128x128xi32> to vector<128x128xf32>
    %23 = arith.mulf %18, %18 : vector<8x128xf32>
    %cst_7 = arith.constant dense<0.000000e+00> : vector<8x128xf32>
    %24 = tpu.matmul %23, %22, %cst_7 {dimension_numbers = #tpu.dot_dimension_numbers<[1], [0], [0], [1], [0, 0, 1, 1], [], []>, precision = #tpu.contract_precision<fp32>} : vector<8x128xf32>, vector<128x128xf32>, vector<8x128xf32> -> vector<8x128xf32>
    %25 = arith.addf %15, %24 : vector<8x128xf32>
    %26 = vector.extract_strided_slice %2 {offsets = [2, 0], sizes = [1, 128], strides = [1, 1]} : vector<4x128xf32> to vector<1x128xf32>
    %27 = vector.broadcast %26 : vector<1x128xf32> to vector<8x128xf32>
    %28 = arith.subf %3, %27 : vector<8x128xf32>
    %c2_i32 = arith.constant 2 : i32
    %29 = vector.broadcast %c2_i32 : i32 to vector<128x128xi32>
    %30 = arith.cmpi eq, %4, %29 : vector<128x128xi32>
    %31 = arith.extui %30 : vector<128x128xi1> to vector<128x128xi32>
    %32 = arith.sitofp %31 : vector<128x128xi32> to vector<128x128xf32>
    %33 = arith.mulf %28, %28 : vector<8x128xf32>
    %cst_8 = arith.constant dense<0.000000e+00> : vector<8x128xf32>
    %34 = tpu.matmul %33, %32, %cst_8 {dimension_numbers = #tpu.dot_dimension_numbers<[1], [0], [0], [1], [0, 0, 1, 1], [], []>, precision = #tpu.contract_precision<fp32>} : vector<8x128xf32>, vector<128x128xf32>, vector<8x128xf32> -> vector<8x128xf32>
    %35 = arith.addf %25, %34 : vector<8x128xf32>
    %36 = vector.extract_strided_slice %2 {offsets = [3, 0], sizes = [1, 128], strides = [1, 1]} : vector<4x128xf32> to vector<1x128xf32>
    %37 = vector.broadcast %36 : vector<1x128xf32> to vector<8x128xf32>
    %38 = arith.subf %3, %37 : vector<8x128xf32>
    %c3_i32 = arith.constant 3 : i32
    %39 = vector.broadcast %c3_i32 : i32 to vector<128x128xi32>
    %40 = arith.cmpi eq, %4, %39 : vector<128x128xi32>
    %41 = arith.extui %40 : vector<128x128xi1> to vector<128x128xi32>
    %42 = arith.sitofp %41 : vector<128x128xi32> to vector<128x128xf32>
    %43 = arith.mulf %38, %38 : vector<8x128xf32>
    %cst_9 = arith.constant dense<0.000000e+00> : vector<8x128xf32>
    %44 = tpu.matmul %43, %42, %cst_9 {dimension_numbers = #tpu.dot_dimension_numbers<[1], [0], [0], [1], [0, 0, 1, 1], [], []>, precision = #tpu.contract_precision<fp32>} : vector<8x128xf32>, vector<128x128xf32>, vector<8x128xf32> -> vector<8x128xf32>
    %45 = arith.addf %35, %44 : vector<8x128xf32>
    %46 = math.sqrt %45 : vector<8x128xf32>
    %cst_10 = arith.constant 0.000000e+00 : f32
    %47 = vector.broadcast %cst_10 : f32 to vector<8x128xf32>
    %48 = arith.subf %47, %46 : vector<8x128xf32>
    %c0_11 = arith.constant 0 : index
    %c0_12 = arith.constant 0 : index
    %49 = vector.load %arg4[%c0_11, %c0_12] : memref<8x128xf32, #tpu.memory_space<vmem>>, vector<8x128xf32>
    tpu.vector_store %arg4[%c0_11, %c0_12], %48 {strides = array<i32>} : memref<8x128xf32, #tpu.memory_space<vmem>>, vector<8x128xf32>,
    %c0_13 = arith.constant 0 : index
    %c0_14 = arith.constant 0 : index
    %50 = vector.load %arg5[%c0_13, %c0_14] : memref<8x128xf32, #tpu.memory_space<vmem>>, vector<8x128xf32>
    tpu.vector_store %arg5[%c0_13, %c0_14], %3 {strides = array<i32>} : memref<8x128xf32, #tpu.memory_space<vmem>>, vector<8x128xf32>,
    return
  }
  func.func @transform_0(%arg0: i32) -> (i32, i32) {
    %c0_i32 = arith.constant 0 : i32
    %c0_i32_0 = arith.constant 0 : i32
    return %arg0, %c0_i32 : i32, i32
  }
  func.func @transform_1(%arg0: i32) -> (i32, i32) {
    %c0_i32 = arith.constant 0 : i32
    %c0_i32_0 = arith.constant 0 : i32
    %c0_i32_1 = arith.constant 0 : i32
    return %c0_i32, %c0_i32_0 : i32, i32
  }
  func.func @transform_2(%arg0: i32) -> (i32, i32) {
    %c0_i32 = arith.constant 0 : i32
    %c0_i32_0 = arith.constant 0 : i32
    %c0_i32_1 = arith.constant 0 : i32
    return %c0_i32, %c0_i32_0 : i32, i32
  }
  func.func @transform_3(%arg0: i32) -> (i32, i32) {
    %c0_i32 = arith.constant 0 : i32
    %c0_i32_0 = arith.constant 0 : i32
    return %arg0, %c0_i32 : i32, i32
  }
  func.func @transform_4(%arg0: i32) -> (i32, i32) {
    %c0_i32 = arith.constant 0 : i32
    %c0_i32_0 = arith.constant 0 : i32
    return %arg0, %c0_i32 : i32, i32
  }
}

</mosaic_0001>

<llo_original>
// kernel: mogp_forward.1
$region0: #{mogp_forward.1}
  #allocation0 [shape = 'u32[]', space=smem, size = 0x4, offset = 0x4, fixed_abs, tag = 'smem constant byte address 0x4 - core index']
  #allocation1 [shape = 'u32[72,128]{1,0:T(1,128)}', space=vmem, size = 0x9000, scoped, tag = 'internal scratch']
  %s0 = inlined_call_operand.hbm [shape: f32[8,8], index: 0, kind: input, shape index: {}]
  %s1 = inlined_call_operand.hbm [shape: f32[8,128], index: 1, kind: input, shape index: {}]
  %s2 = inlined_call_operand.hbm [shape: f32[4,128], index: 2, kind: input, shape index: {}]
  %s3 = inlined_call_operand.vmem [shape: f32[8,128], index: 3, kind: output, shape index: {0}]
  %s4 = inlined_call_operand.hbm [shape: f32[8,128], index: 4, kind: output, shape index: {1}]
  %5 = xla_tuple %s3, %s4
  %s6 = sld [smem:[#allocation0]]
  $region42: #{mogp_forward.1} parent=0
    _
  %s8 = ssub.s32 1, %s6
  %s9 = scalar_select 0, %s8, %s6
  $region1: #{mogp_forward.1} parent=0
    #allocation2 [shape = 'u8[4096]{0}', space=vmem, size = 0x1000, scoped, tag = 'input window, operand 0, single buffered']
    #allocation3 [shape = 's32[1]{0}', space=sflag, size = 0x4, scoped, tag = 'scoped memory for mogp_forward.1']
    #allocation4 [shape = 's32[1]{0}', space=sflag, size = 0x4, scoped, tag = 'scoped memory for mogp_forward.1']
    #allocation5 [shape = 'u8[4096]{0}', space=vmem, size = 0x1000, scoped, tag = 'input window, operand 1, single buffered']
    #allocation6 [shape = 's32[1]{0}', space=sflag, size = 0x4, scoped, tag = 'scoped memory for mogp_forward.1']
    #allocation7 [shape = 'u8[2048]{0}', space=vmem, size = 0x800, scoped, tag = 'input window, operand 2, single buffered']
    #allocation8 [shape = 'u8[4096]{0}', space=vmem, size = 0x1000, scoped, tag = 'output window, operand 1, single buffered']
    %10 = vsyncpa [#allocation3], 0
    %11 = vsyncpa [#allocation6], 0
    %12 = vsyncpa [#allocation4], 0
    // Predicated region
    $region2: #{mogp_forward.1} parent=1 // pred_check
      _
    $region3: #{mogp_forward.1} parent=1 // pred_check_branch
      %14 = sbr.rel (0) target = $region5
    $region4: #{mogp_forward.1} parent=1 // pred_region
      %16 = vsyncadd [#allocation3], 0
      %s18 = sshll.u32 %s0, 4
      %s19 = int_to_ptr.hbm [resolvable:$true] %s18
      %s20 = sshll.u32 [#allocation2], 4
      %s21 = int_to_ptr.vmem [resolvable:$true] %s20
      %23 = dma.hbm_to_vmem [thread:$0]  %s19, 128, %s21, [#allocation3]
    $region5: #{mogp_forward.1} parent=1 // pred_fallthru
      _
    // Predicated region
    $region6: #{mogp_forward.1} parent=1 // pred_check
      _
    $region7: #{mogp_forward.1} parent=1 // pred_check_branch
      %25 = sbr.rel (0) target = $region9
    $region8: #{mogp_forward.1} parent=1 // pred_region
      %27 = vsyncadd [#allocation6], 0
      %s29 = sshll.u32 %s1, 4
      %s30 = int_to_ptr.hbm [resolvable:$true] %s29
      %s31 = sshll.u32 [#allocation5], 4
      %s32 = int_to_ptr.vmem [resolvable:$true] %s31
      %34 = dma.hbm_to_vmem [thread:$0]  %s30, 128, %s32, [#allocation6]
    $region9: #{mogp_forward.1} parent=1 // pred_fallthru
      _
    // Predicated region
    $region10: #{mogp_forward.1} parent=1 // pred_check
      _
    $region11: #{mogp_forward.1} parent=1 // pred_check_branch
      %36 = sbr.rel (0) target = $region13
    $region12: #{mogp_forward.1} parent=1 // pred_region
      %38 = vsyncadd [#allocation6], 0
      %s40 = sshll.u32 %s2, 4
      %s41 = int_to_ptr.hbm [resolvable:$true] %s40
      %s42 = sshll.u32 [#allocation7], 4
      %s43 = int_to_ptr.vmem [resolvable:$true] %s42
      %45 = dma.hbm_to_vmem [thread:$0]  %s41, 64, %s43, [#allocation6]
    $region13: #{mogp_forward.1} parent=1 // pred_fallthru
      _
    // Predicated region
    $region14: #{mogp_forward.1} parent=1 // pred_check
      _
    $region15: #{mogp_forward.1} parent=1 // pred_check_branch
      %47 = sbr.rel (0) target = $region17
    $region16: #{mogp_forward.1} parent=1 // pred_region
      %49 = dma.done [#allocation3], 128
    $region17: #{mogp_forward.1} parent=1 // pred_fallthru
      _
    // Predicated region
    $region18: #{mogp_forward.1} parent=1 // pred_check
      _
    $region19: #{mogp_forward.1} parent=1 // pred_check_branch
      %51 = sbr.rel (0) target = $region21
    $region20: #{mogp_forward.1} parent=1 // pred_region
      %53 = dma.done [#allocation6], 128
    $region21: #{mogp_forward.1} parent=1 // pred_fallthru
      _
    // Predicated region
    $region22: #{mogp_forward.1} parent=1 // pred_check
      _
    $region23: #{mogp_forward.1} parent=1 // pred_check_branch
      %55 = sbr.rel (0) target = $region25
    $region24: #{mogp_forward.1} parent=1 // pred_region
      %57 = dma.done [#allocation6], 64
    $region25: #{mogp_forward.1} parent=1 // pred_fallthru
      _
    %v58 = vld [vmem:[#allocation2] sm:$0xff]
    %v59 = vld [vmem:[#allocation5] sm:$0xff]
    %v60 = vld [vmem:[#allocation7] sm:$0xf]
    %vm61 = vcmask 64512
    %v63 = vsel %vm61, %v58, 0
    %65 = vmatpush.msra.mxu0 0.0
    %66 = vmatpush.msra.mxu0 0.0
    %67 = vmatpush.msra.mxu0 0.0
    %68 = vmatpush.msra.mxu0 0.0
    %69 = vmatpush.msra.mxu0 0.0
    %70 = vmatpush.msra.mxu0 0.0
    %71 = vmatpush.msra.mxu0 0.0
    %72 = vmatpush.msra.mxu0 0.0
    %73 = vmatpush.msra.mxu0 0.0
    %74 = vmatpush.msra.mxu0 0.0
    %75 = vmatpush.msra.mxu0 0.0
    %76 = vmatpush.msra.mxu0 0.0
    %77 = vmatpush.msra.mxu0 0.0
    %78 = vmatpush.msra.mxu0 0.0
    %79 = vmatpush.msra.mxu0 0.0
    %v80 = vand.u32 %v59, 4294901760
    %81 = vmatpush.msra.mxu0 %v80
    %v82 = vand.u32 %v63, 4294901760
    %v83 = vsub.f32 %v63, %v82
    %v84 = vand.u32 %v83, 4294901760
    %v85 = vsub.f32 %v83, %v84
    %v86 = vand.u32 %v85, 4294901760
    %87 = vmatmul.f32.gmra.mxu0 %v86
    %v88 = vpop.f32.mrf.mxu0
    %v89 = vadd.f32 0.0, %v88
    %90 = vdwg.mxu0
    %91 = vmatpush.msra.mxu0 0.0
    %92 = vmatpush.msra.mxu0 0.0
    %93 = vmatpush.msra.mxu0 0.0
    %94 = vmatpush.msra.mxu0 0.0
    %95 = vmatpush.msra.mxu0 0.0
    %96 = vmatpush.msra.mxu0 0.0
    %97 = vmatpush.msra.mxu0 0.0
    %98 = vmatpush.msra.mxu0 0.0
    %99 = vmatpush.msra.mxu0 0.0
    %100 = vmatpush.msra.mxu0 0.0
    %101 = vmatpush.msra.mxu0 0.0
    %102 = vmatpush.msra.mxu0 0.0
    %103 = vmatpush.msra.mxu0 0.0
    %104 = vmatpush.msra.mxu0 0.0
    %105 = vmatpush.msra.mxu0 0.0
    %v106 = vand.u32 %v59, 4294901760
    %v107 = vsub.f32 %v59, %v106
    %v108 = vand.u32 %v107, 4294901760
    %v109 = vsub.f32 %v107, %v108
    %v110 = vand.u32 %v109, 4294901760
    %111 = vmatpush.msra.mxu0 %v110
    %v112 = vand.u32 %v63, 4294901760
    %113 = vmatmul.f32.gmra.mxu0 %v112
    %v114 = vpop.f32.mrf.mxu0
    %v115 = vadd.f32 %v89, %v114
    %116 = vdwg.mxu0
    %117 = vmatpush.msra.mxu0 0.0
    %118 = vmatpush.msra.mxu0 0.0
    %119 = vmatpush.msra.mxu0 0.0
    %120 = vmatpush.msra.mxu0 0.0
    %121 = vmatpush.msra.mxu0 0.0
    %122 = vmatpush.msra.mxu0 0.0
    %123 = vmatpush.msra.mxu0 0.0
    %124 = vmatpush.msra.mxu0 0.0
    %125 = vmatpush.msra.mxu0 0.0
    %126 = vmatpush.msra.mxu0 0.0
    %127 = vmatpush.msra.mxu0 0.0
    %128 = vmatpush.msra.mxu0 0.0
    %129 = vmatpush.msra.mxu0 0.0
    %130 = vmatpush.msra.mxu0 0.0
    %131 = vmatpush.msra.mxu0 0.0
    %v132 = vand.u32 %v59, 4294901760
    %v133 = vsub.f32 %v59, %v132
    %134 = vmatpush.msra.mxu0 %v133
    %v135 = vand.u32 %v63, 4294901760
    %v136 = vsub.f32 %v63, %v135
    %137 = vmatmul.f32.gmra.mxu0 %v136
    %v138 = vpop.f32.mrf.mxu0
    %v139 = vadd.f32 %v115, %v138
    %140 = vdwg.mxu0
    %141 = vmatpush.msra.mxu0 0.0
    %142 = vmatpush.msra.mxu0 0.0
    %143 = vmatpush.msra.mxu0 0.0
    %144 = vmatpush.msra.mxu0 0.0
    %145 = vmatpush.msra.mxu0 0.0
    %146 = vmatpush.msra.mxu0 0.0
    %147 = vmatpush.msra.mxu0 0.0
    %148 = vmatpush.msra.mxu0 0.0
    %149 = vmatpush.msra.mxu0 0.0
    %150 = vmatpush.msra.mxu0 0.0
    %151 = vmatpush.msra.mxu0 0.0
    %152 = vmatpush.msra.mxu0 0.0
    %153 = vmatpush.msra.mxu0 0.0
    %154 = vmatpush.msra.mxu0 0.0
    %155 = vmatpush.msra.mxu0 0.0
    %v156 = vand.u32 %v59, 4294901760
    %157 = vmatpush.msra.mxu0 %v156
    %v158 = vand.u32 %v63, 4294901760
    %v159 = vsub.f32 %v63, %v158
    %v160 = vand.u32 %v159, 4294901760
    %161 = vmatmul.f32.gmra.mxu0 %v160
    %v162 = vpop.f32.mrf.mxu0
    %v163 = vadd.f32 %v139, %v162
    %164 = vdwg.mxu0
    %165 = vmatpush.msra.mxu0 0.0
    %166 = vmatpush.msra.mxu0 0.0
    %167 = vmatpush.msra.mxu0 0.0
    %168 = vmatpush.msra.mxu0 0.0
    %169 = vmatpush.msra.mxu0 0.0
    %170 = vmatpush.msra.mxu0 0.0
    %171 = vmatpush.msra.mxu0 0.0
    %172 = vmatpush.msra.mxu0 0.0
    %173 = vmatpush.msra.mxu0 0.0
    %174 = vmatpush.msra.mxu0 0.0
    %175 = vmatpush.msra.mxu0 0.0
    %176 = vmatpush.msra.mxu0 0.0
    %177 = vmatpush.msra.mxu0 0.0
    %178 = vmatpush.msra.mxu0 0.0
    %179 = vmatpush.msra.mxu0 0.0
    %v180 = vand.u32 %v59, 4294901760
    %v181 = vsub.f32 %v59, %v180
    %v182 = vand.u32 %v181, 4294901760
    %183 = vmatpush.msra.mxu0 %v182
    %v184 = vand.u32 %v63, 4294901760
    %185 = vmatmul.f32.gmra.mxu0 %v184
    %v186 = vpop.f32.mrf.mxu0
    %v187 = vadd.f32 %v163, %v186
    %188 = vdwg.mxu0
    %189 = vmatpush.msra.mxu0 0.0
    %190 = vmatpush.msra.mxu0 0.0
    %191 = vmatpush.msra.mxu0 0.0
    %192 = vmatpush.msra.mxu0 0.0
    %193 = vmatpush.msra.mxu0 0.0
    %194 = vmatpush.msra.mxu0 0.0
    %195 = vmatpush.msra.mxu0 0.0
    %196 = vmatpush.msra.mxu0 0.0
    %197 = vmatpush.msra.mxu0 0.0
    %198 = vmatpush.msra.mxu0 0.0
    %199 = vmatpush.msra.mxu0 0.0
    %200 = vmatpush.msra.mxu0 0.0
    %201 = vmatpush.msra.mxu0 0.0
    %202 = vmatpush.msra.mxu0 0.0
    %203 = vmatpush.msra.mxu0 0.0
    %v204 = vand.u32 %v59, 4294901760
    %205 = vmatpush.msra.mxu0 %v204
    %v206 = vand.u32 %v63, 4294901760
    %207 = vmatmul.f32.gmra.mxu0 %v206
    %v208 = vpop.f32.mrf.mxu0
    %v209 = vadd.f32 %v187, %v208
    %210 = vdwg.mxu0
    %v211 = vlaneseq
    %v212 = vand.u32 %v211, 127
    %v213 = vperm.slane %v60, 0
    %v214 = vsub.f32 %v209, %v213
    %vm215 = vcmp.eq.s32.totalorder %v212, 0
    %v216 = vsel %vm215, 1, 0
    %v217 = vcvt.s32.f32 %v216
    %v218 = vmul.f32 %v214, %v214
    %v219 = vperm.slane %v60, 1
    %v220 = vsub.f32 %v209, %v219
    %vm221 = vcmp.eq.s32.totalorder %v212, 1
    %v222 = vsel %vm221, 1, 0
    %v223 = vcvt.s32.f32 %v222
    %v224 = vmul.f32 %v220, %v220
    %v225 = vand.u32 %v223, 4294901760
    %226 = vmatpush.msra.mxu0 %v225
    %v227 = vand.u32 %v223, 4294901760
    %228 = vmatpush.msra.mxu0 %v227
    %v229 = vand.u32 %v223, 4294901760
    %230 = vmatpush.msra.mxu0 %v229
    %v231 = vand.u32 %v223, 4294901760
    %232 = vmatpush.msra.mxu0 %v231
    %v233 = vand.u32 %v223, 4294901760
    %234 = vmatpush.msra.mxu0 %v233
    %v235 = vand.u32 %v223, 4294901760
    %236 = vmatpush.msra.mxu0 %v235
    %v237 = vand.u32 %v223, 4294901760
    %238 = vmatpush.msra.mxu0 %v237
    %v239 = vand.u32 %v223, 4294901760
    %240 = vmatpush.msra.mxu0 %v239
    %v241 = vand.u32 %v223, 4294901760
    %242 = vmatpush.msra.mxu0 %v241
    %v243 = vand.u32 %v223, 4294901760
    %244 = vmatpush.msra.mxu0 %v243
    %v245 = vand.u32 %v223, 4294901760
    %246 = vmatpush.msra.mxu0 %v245
    %v247 = vand.u32 %v223, 4294901760
    %248 = vmatpush.msra.mxu0 %v247
    %v249 = vand.u32 %v223, 4294901760
    %250 = vmatpush.msra.mxu0 %v249
    %v251 = vand.u32 %v223, 4294901760
    %252 = vmatpush.msra.mxu0 %v251
    %v253 = vand.u32 %v223, 4294901760
    %254 = vmatpush.msra.mxu0 %v253
    %v255 = vand.u32 %v223, 4294901760
    %256 = vmatpush.msra.mxu0 %v255
    %v257 = vand.u32 %v224, 4294901760
    %v258 = vsub.f32 %v224, %v257
    %v259 = vand.u32 %v258, 4294901760
    %v260 = vsub.f32 %v258, %v259
    %v261 = vand.u32 %v260, 4294901760
    %262 = vmatmul.f32.gmra.mxu0 %v261
    %v263 = vpop.f32.mrf.mxu0
    %v264 = vadd.f32 0.0, %v263
    %265 = vdwg.mxu0
    %v266 = vand.u32 %v223, 4294901760
    %v267 = vsub.f32 %v223, %v266
    %v268 = vand.u32 %v267, 4294901760
    %v269 = vsub.f32 %v267, %v268
    %v270 = vand.u32 %v269, 4294901760
    %271 = vmatpush.msra.mxu0 %v270
    %v272 = vand.u32 %v223, 4294901760
    %v273 = vsub.f32 %v223, %v272
    %v274 = vand.u32 %v273, 4294901760
    %v275 = vsub.f32 %v273, %v274
    %v276 = vand.u32 %v275, 4294901760
    %277 = vmatpush.msra.mxu0 %v276
    %v278 = vand.u32 %v223, 4294901760
    %v279 = vsub.f32 %v223, %v278
    %v280 = vand.u32 %v279, 4294901760
    %v281 = vsub.f32 %v279, %v280
    %v282 = vand.u32 %v281, 4294901760
    %283 = vmatpush.msra.mxu0 %v282
    %v284 = vand.u32 %v223, 4294901760
    %v285 = vsub.f32 %v223, %v284
    %v286 = vand.u32 %v285, 4294901760
    %v287 = vsub.f32 %v285, %v286
    %v288 = vand.u32 %v287, 4294901760
    %289 = vmatpush.msra.mxu0 %v288
    %v290 = vand.u32 %v223, 4294901760
    %v291 = vsub.f32 %v223, %v290
    %v292 = vand.u32 %v291, 4294901760
    %v293 = vsub.f32 %v291, %v292
    %v294 = vand.u32 %v293, 4294901760
    %295 = vmatpush.msra.mxu0 %v294
    %v296 = vand.u32 %v223, 4294901760
    %v297 = vsub.f32 %v223, %v296
    %v298 = vand.u32 %v297, 4294901760
    %v299 = vsub.f32 %v297, %v298
    %v300 = vand.u32 %v299, 4294901760
    %301 = vmatpush.msra.mxu0 %v300
    %v302 = vand.u32 %v223, 4294901760
    %v303 = vsub.f32 %v223, %v302
    %v304 = vand.u32 %v303, 4294901760
    %v305 = vsub.f32 %v303, %v304
    %v306 = vand.u32 %v305, 4294901760
    %307 = vmatpush.msra.mxu0 %v306
    %v308 = vand.u32 %v223, 4294901760
    %v309 = vsub.f32 %v223, %v308
    %v310 = vand.u32 %v309, 4294901760
    %v311 = vsub.f32 %v309, %v310
    %v312 = vand.u32 %v311, 4294901760
    %313 = vmatpush.msra.mxu0 %v312
    %v314 = vand.u32 %v223, 4294901760
    %v315 = vsub.f32 %v223, %v314
    %v316 = vand.u32 %v315, 4294901760
    %v317 = vsub.f32 %v315, %v316
    %v318 = vand.u32 %v317, 4294901760
    %319 = vmatpush.msra.mxu0 %v318
    %v320 = vand.u32 %v223, 4294901760
    %v321 = vsub.f32 %v223, %v320
    %v322 = vand.u32 %v321, 4294901760
    %v323 = vsub.f32 %v321, %v322
    %v324 = vand.u32 %v323, 4294901760
    %325 = vmatpush.msra.mxu0 %v324
    %v326 = vand.u32 %v223, 4294901760
    %v327 = vsub.f32 %v223, %v326
    %v328 = vand.u32 %v327, 4294901760
    %v329 = vsub.f32 %v327, %v328
    %v330 = vand.u32 %v329, 4294901760
    %331 = vmatpush.msra.mxu0 %v330
    %v332 = vand.u32 %v223, 4294901760
    %v333 = vsub.f32 %v223, %v332
    %v334 = vand.u32 %v333, 4294901760
    %v335 = vsub.f32 %v333, %v334
    %v336 = vand.u32 %v335, 4294901760
    %337 = vmatpush.msra.mxu0 %v336
    %v338 = vand.u32 %v223, 4294901760
    %v339 = vsub.f32 %v223, %v338
    %v340 = vand.u32 %v339, 4294901760
    %v341 = vsub.f32 %v339, %v340
    %v342 = vand.u32 %v341, 4294901760
    %343 = vmatpush.msra.mxu0 %v342
    %v344 = vand.u32 %v223, 4294901760
    %v345 = vsub.f32 %v223, %v344
    %v346 = vand.u32 %v345, 4294901760
    %v347 = vsub.f32 %v345, %v346
    %v348 = vand.u32 %v347, 4294901760
    %349 = vmatpush.msra.mxu0 %v348
    %v350 = vand.u32 %v223, 4294901760
    %v351 = vsub.f32 %v223, %v350
    %v352 = vand.u32 %v351, 4294901760
    %v353 = vsub.f32 %v351, %v352
    %v354 = vand.u32 %v353, 4294901760
    %355 = vmatpush.msra.mxu0 %v354
    %v356 = vand.u32 %v223, 4294901760
    %v357 = vsub.f32 %v223, %v356
    %v358 = vand.u32 %v357, 4294901760
    %v359 = vsub.f32 %v357, %v358
    %v360 = vand.u32 %v359, 4294901760
    %361 = vmatpush.msra.mxu0 %v360
    %v362 = vand.u32 %v224, 4294901760
    %363 = vmatmul.f32.gmra.mxu0 %v362
    %v364 = vpop.f32.mrf.mxu0
    %v365 = vadd.f32 %v264, %v364
    %366 = vdwg.mxu0
    %v367 = vand.u32 %v223, 4294901760
    %v368 = vsub.f32 %v223, %v367
    %369 = vmatpush.msra.mxu0 %v368
    %v370 = vand.u32 %v223, 4294901760
    %v371 = vsub.f32 %v223, %v370
    %372 = vmatpush.msra.mxu0 %v371
    %v373 = vand.u32 %v223, 4294901760
    %v374 = vsub.f32 %v223, %v373
    %375 = vmatpush.msra.mxu0 %v374
    %v376 = vand.u32 %v223, 4294901760
    %v377 = vsub.f32 %v223, %v376
    %378 = vmatpush.msra.mxu0 %v377
    %v379 = vand.u32 %v223, 4294901760
    %v380 = vsub.f32 %v223, %v379
    %381 = vmatpush.msra.mxu0 %v380
    %v382 = vand.u32 %v223, 4294901760
    %v383 = vsub.f32 %v223, %v382
    %384 = vmatpush.msra.mxu0 %v383
    %v385 = vand.u32 %v223, 4294901760
    %v386 = vsub.f32 %v223, %v385
    %387 = vmatpush.msra.mxu0 %v386
    %v388 = vand.u32 %v223, 4294901760
    %v389 = vsub.f32 %v223, %v388
    %390 = vmatpush.msra.mxu0 %v389
    %v391 = vand.u32 %v223, 4294901760
    %v392 = vsub.f32 %v223, %v391
    %393 = vmatpush.msra.mxu0 %v392
    %v394 = vand.u32 %v223, 4294901760
    %v395 = vsub.f32 %v223, %v394
    %396 = vmatpush.msra.mxu0 %v395
    %v397 = vand.u32 %v223, 4294901760
    %v398 = vsub.f32 %v223, %v397
    %399 = vmatpush.msra.mxu0 %v398
    %v400 = vand.u32 %v223, 4294901760
    %v401 = vsub.f32 %v223, %v400
    %402 = vmatpush.msra.mxu0 %v401
    %v403 = vand.u32 %v223, 4294901760
    %v404 = vsub.f32 %v223, %v403
    %405 = vmatpush.msra.mxu0 %v404
    %v406 = vand.u32 %v223, 4294901760
    %v407 = vsub.f32 %v223, %v406
    %408 = vmatpush.msra.mxu0 %v407
    %v409 = vand.u32 %v223, 4294901760
    %v410 = vsub.f32 %v223, %v409
    %411 = vmatpush.msra.mxu0 %v410
    %v412 = vand.u32 %v223, 4294901760
    %v413 = vsub.f32 %v223, %v412
    %414 = vmatpush.msra.mxu0 %v413
    %v415 = vand.u32 %v224, 4294901760
    %v416 = vsub.f32 %v224, %v415
    %417 = vmatmul.f32.gmra.mxu0 %v416
    %v418 = vpop.f32.mrf.mxu0
    %v419 = vadd.f32 %v365, %v418
    %420 = vdwg.mxu0
    %v421 = vand.u32 %v223, 4294901760
    %422 = vmatpush.msra.mxu0 %v421
    %v423 = vand.u32 %v223, 4294901760
    %424 = vmatpush.msra.mxu0 %v423
    %v425 = vand.u32 %v223, 4294901760
    %426 = vmatpush.msra.mxu0 %v425
    %v427 = vand.u32 %v223, 4294901760
    %428 = vmatpush.msra.mxu0 %v427
    %v429 = vand.u32 %v223, 4294901760
    %430 = vmatpush.msra.mxu0 %v429
    %v431 = vand.u32 %v223, 4294901760
    %432 = vmatpush.msra.mxu0 %v431
    %v433 = vand.u32 %v223, 4294901760
    %434 = vmatpush.msra.mxu0 %v433
    %v435 = vand.u32 %v223, 4294901760
    %436 = vmatpush.msra.mxu0 %v435
    %v437 = vand.u32 %v223, 4294901760
    %438 = vmatpush.msra.mxu0 %v437
    %v439 = vand.u32 %v223, 4294901760
    %440 = vmatpush.msra.mxu0 %v439
    %v441 = vand.u32 %v223, 4294901760
    %442 = vmatpush.msra.mxu0 %v441
    %v443 = vand.u32 %v223, 4294901760
    %444 = vmatpush.msra.mxu0 %v443
    %v445 = vand.u32 %v223, 4294901760
    %446 = vmatpush.msra.mxu0 %v445
    %v447 = vand.u32 %v223, 4294901760
    %448 = vmatpush.msra.mxu0 %v447
    %v449 = vand.u32 %v223, 4294901760
    %450 = vmatpush.msra.mxu0 %v449
    %v451 = vand.u32 %v223, 4294901760
    %452 = vmatpush.msra.mxu0 %v451
    %v453 = vand.u32 %v224, 4294901760
    %v454 = vsub.f32 %v224, %v453
    %v455 = vand.u32 %v454, 4294901760
    %456 = vmatmul.f32.gmra.mxu0 %v455
    %v457 = vpop.f32.mrf.mxu0
    %v458 = vadd.f32 %v419, %v457
    %459 = vdwg.mxu0
    %v460 = vand.u32 %v223, 4294901760
    %v461 = vsub.f32 %v223, %v460
    %v462 = vand.u32 %v461, 4294901760
    %463 = vmatpush.msra.mxu0 %v462
    %v464 = vand.u32 %v223, 4294901760
    %v465 = vsub.f32 %v223, %v464
    %v466 = vand.u32 %v465, 4294901760
    %467 = vmatpush.msra.mxu0 %v466
    %v468 = vand.u32 %v223, 4294901760
    %v469 = vsub.f32 %v223, %v468
    %v470 = vand.u32 %v469, 4294901760
    %471 = vmatpush.msra.mxu0 %v470
    %v472 = vand.u32 %v223, 4294901760
    %v473 = vsub.f32 %v223, %v472
    %v474 = vand.u32 %v473, 4294901760
    %475 = vmatpush.msra.mxu0 %v474
    %v476 = vand.u32 %v223, 4294901760
    %v477 = vsub.f32 %v223, %v476
    %v478 = vand.u32 %v477, 4294901760
    %479 = vmatpush.msra.mxu0 %v478
    %v480 = vand.u32 %v223, 4294901760
    %v481 = vsub.f32 %v223, %v480
    %v482 = vand.u32 %v481, 4294901760
    %483 = vmatpush.msra.mxu0 %v482
    %v484 = vand.u32 %v223, 4294901760
    %v485 = vsub.f32 %v223, %v484
    %v486 = vand.u32 %v485, 4294901760
    %487 = vmatpush.msra.mxu0 %v486
    %v488 = vand.u32 %v223, 4294901760
    %v489 = vsub.f32 %v223, %v488
    %v490 = vand.u32 %v489, 4294901760
    %491 = vmatpush.msra.mxu0 %v490
    %v492 = vand.u32 %v223, 4294901760
    %v493 = vsub.f32 %v223, %v492
    %v494 = vand.u32 %v493, 4294901760
    %495 = vmatpush.msra.mxu0 %v494
    %v496 = vand.u32 %v223, 4294901760
    %v497 = vsub.f32 %v223, %v496
    %v498 = vand.u32 %v497, 4294901760
    %499 = vmatpush.msra.mxu0 %v498
    %v500 = vand.u32 %v223, 4294901760
    %v501 = vsub.f32 %v223, %v500
    %v502 = vand.u32 %v501, 4294901760
    %503 = vmatpush.msra.mxu0 %v502
    %v504 = vand.u32 %v223, 4294901760
    %v505 = vsub.f32 %v223, %v504
    %v506 = vand.u32 %v505, 4294901760
    %507 = vmatpush.msra.mxu0 %v506
    %v508 = vand.u32 %v223, 4294901760
    %v509 = vsub.f32 %v223, %v508
    %v510 = vand.u32 %v509, 4294901760
    %511 = vmatpush.msra.mxu0 %v510
    %v512 = vand.u32 %v223, 4294901760
    %v513 = vsub.f32 %v223, %v512
    %v514 = vand.u32 %v513, 4294901760
    %515 = vmatpush.msra.mxu0 %v514
    %v516 = vand.u32 %v223, 4294901760
    %v517 = vsub.f32 %v223, %v516
    %v518 = vand.u32 %v517, 4294901760
    %519 = vmatpush.msra.mxu0 %v518
    %v520 = vand.u32 %v223, 4294901760
    %v521 = vsub.f32 %v223, %v520
    %v522 = vand.u32 %v521, 4294901760
    %523 = vmatpush.msra.mxu0 %v522
    %v524 = vand.u32 %v224, 4294901760
    %525 = vmatmul.f32.gmra.mxu0 %v524
    %v526 = vpop.f32.mrf.mxu0
    %v527 = vadd.f32 %v458, %v526
    %528 = vdwg.mxu0
    %v529 = vand.u32 %v223, 4294901760
    %530 = vmatpush.msra.mxu0 %v529
    %v531 = vand.u32 %v223, 4294901760
    %532 = vmatpush.msra.mxu0 %v531
    %v533 = vand.u32 %v223, 4294901760
    %534 = vmatpush.msra.mxu0 %v533
    %v535 = vand.u32 %v223, 4294901760
    %536 = vmatpush.msra.mxu0 %v535
    %v537 = vand.u32 %v223, 4294901760
    %538 = vmatpush.msra.mxu0 %v537
    %v539 = vand.u32 %v223, 4294901760
    %540 = vmatpush.msra.mxu0 %v539
    %v541 = vand.u32 %v223, 4294901760
    %542 = vmatpush.msra.mxu0 %v541
    %v543 = vand.u32 %v223, 4294901760
    %544 = vmatpush.msra.mxu0 %v543
    %v545 = vand.u32 %v223, 4294901760
    %546 = vmatpush.msra.mxu0 %v545
    %v547 = vand.u32 %v223, 4294901760
    %548 = vmatpush.msra.mxu0 %v547
    %v549 = vand.u32 %v223, 4294901760
    %550 = vmatpush.msra.mxu0 %v549
    %v551 = vand.u32 %v223, 4294901760
    %552 = vmatpush.msra.mxu0 %v551
    %v553 = vand.u32 %v223, 4294901760
    %554 = vmatpush.msra.mxu0 %v553
    %v555 = vand.u32 %v223, 4294901760
    %556 = vmatpush.msra.mxu0 %v555
    %v557 = vand.u32 %v223, 4294901760
    %558 = vmatpush.msra.mxu0 %v557
    %v559 = vand.u32 %v223, 4294901760
    %560 = vmatpush.msra.mxu0 %v559
    %v561 = vand.u32 %v224, 4294901760
    %562 = vmatmul.f32.gmra.mxu0 %v561
    %v563 = vpop.f32.mrf.mxu0
    %v564 = vadd.f32 %v527, %v563
    %565 = vdwg.mxu0
    %v566 = vand.u32 %v217, 4294901760
    %567 = vmatpush.msra.mxu0 %v566
    %v568 = vand.u32 %v217, 4294901760
    %569 = vmatpush.msra.mxu0 %v568
    %v570 = vand.u32 %v217, 4294901760
    %571 = vmatpush.msra.mxu0 %v570
    %v572 = vand.u32 %v217, 4294901760
    %573 = vmatpush.msra.mxu0 %v572
    %v574 = vand.u32 %v217, 4294901760
    %575 = vmatpush.msra.mxu0 %v574
    %v576 = vand.u32 %v217, 4294901760
    %577 = vmatpush.msra.mxu0 %v576
    %v578 = vand.u32 %v217, 4294901760
    %579 = vmatpush.msra.mxu0 %v578
    %v580 = vand.u32 %v217, 4294901760
    %581 = vmatpush.msra.mxu0 %v580
    %v582 = vand.u32 %v217, 4294901760
    %583 = vmatpush.msra.mxu0 %v582
    %v584 = vand.u32 %v217, 4294901760
    %585 = vmatpush.msra.mxu0 %v584
    %v586 = vand.u32 %v217, 4294901760
    %587 = vmatpush.msra.mxu0 %v586
    %v588 = vand.u32 %v217, 4294901760
    %589 = vmatpush.msra.mxu0 %v588
    %v590 = vand.u32 %v217, 4294901760
    %591 = vmatpush.msra.mxu0 %v590
    %v592 = vand.u32 %v217, 4294901760
    %593 = vmatpush.msra.mxu0 %v592
    %v594 = vand.u32 %v217, 4294901760
    %595 = vmatpush.msra.mxu0 %v594
    %v596 = vand.u32 %v217, 4294901760
    %597 = vmatpush.msra.mxu0 %v596
    %v598 = vand.u32 %v218, 4294901760
    %v599 = vsub.f32 %v218, %v598
    %v600 = vand.u32 %v599, 4294901760
    %v601 = vsub.f32 %v599, %v600
    %v602 = vand.u32 %v601, 4294901760
    %603 = vmatmul.f32.gmra.mxu0 %v602
    %v604 = vpop.f32.mrf.mxu0
    %v605 = vadd.f32 %v564, %v604
    %606 = vdwg.mxu0
    %v607 = vand.u32 %v217, 4294901760
    %v608 = vsub.f32 %v217, %v607
    %v609 = vand.u32 %v608, 4294901760
    %v610 = vsub.f32 %v608, %v609
    %v611 = vand.u32 %v610, 4294901760
    %612 = vmatpush.msra.mxu0 %v611
    %v613 = vand.u32 %v217, 4294901760
    %v614 = vsub.f32 %v217, %v613
    %v615 = vand.u32 %v614, 4294901760
    %v616 = vsub.f32 %v614, %v615
    %v617 = vand.u32 %v616, 4294901760
    %618 = vmatpush.msra.mxu0 %v617
    %v619 = vand.u32 %v217, 4294901760
    %v620 = vsub.f32 %v217, %v619
    %v621 = vand.u32 %v620, 4294901760
    %v622 = vsub.f32 %v620, %v621
    %v623 = vand.u32 %v622, 4294901760
    %624 = vmatpush.msra.mxu0 %v623
    %v625 = vand.u32 %v217, 4294901760
    %v626 = vsub.f32 %v217, %v625
    %v627 = vand.u32 %v626, 4294901760
    %v628 = vsub.f32 %v626, %v627
    %v629 = vand.u32 %v628, 4294901760
    %630 = vmatpush.msra.mxu0 %v629
    %v631 = vand.u32 %v217, 4294901760
    %v632 = vsub.f32 %v217, %v631
    %v633 = vand.u32 %v632, 4294901760
    %v634 = vsub.f32 %v632, %v633
    %v635 = vand.u32 %v634, 4294901760
    %636 = vmatpush.msra.mxu0 %v635
    %v637 = vand.u32 %v217, 4294901760
    %v638 = vsub.f32 %v217, %v637
    %v639 = vand.u32 %v638, 4294901760
    %v640 = vsub.f32 %v638, %v639
    %v641 = vand.u32 %v640, 4294901760
    %642 = vmatpush.msra.mxu0 %v641
    %v643 = vand.u32 %v217, 4294901760
    %v644 = vsub.f32 %v217, %v643
    %v645 = vand.u32 %v644, 4294901760
    %v646 = vsub.f32 %v644, %v645
    %v647 = vand.u32 %v646, 4294901760
    %648 = vmatpush.msra.mxu0 %v647
    %v649 = vand.u32 %v217, 4294901760
    %v650 = vsub.f32 %v217, %v649
    %v651 = vand.u32 %v650, 4294901760
    %v652 = vsub.f32 %v650, %v651
    %v653 = vand.u32 %v652, 4294901760
    %654 = vmatpush.msra.mxu0 %v653
    %v655 = vand.u32 %v217, 4294901760
    %v656 = vsub.f32 %v217, %v655
    %v657 = vand.u32 %v656, 4294901760
    %v658 = vsub.f32 %v656, %v657
    %v659 = vand.u32 %v658, 4294901760
    %660 = vmatpush.msra.mxu0 %v659
    %v661 = vand.u32 %v217, 4294901760
    %v662 = vsub.f32 %v217, %v661
    %v663 = vand.u32 %v662, 4294901760
    %v664 = vsub.f32 %v662, %v663
    %v665 = vand.u32 %v664, 4294901760
    %666 = vmatpush.msra.mxu0 %v665
    %v667 = vand.u32 %v217, 4294901760
    %v668 = vsub.f32 %v217, %v667
    %v669 = vand.u32 %v668, 4294901760
    %v670 = vsub.f32 %v668, %v669
    %v671 = vand.u32 %v670, 4294901760
    %672 = vmatpush.msra.mxu0 %v671
    %v673 = vand.u32 %v217, 4294901760
    %v674 = vsub.f32 %v217, %v673
    %v675 = vand.u32 %v674, 4294901760
    %v676 = vsub.f32 %v674, %v675
    %v677 = vand.u32 %v676, 4294901760
    %678 = vmatpush.msra.mxu0 %v677
    %v679 = vand.u32 %v217, 4294901760
    %v680 = vsub.f32 %v217, %v679
    %v681 = vand.u32 %v680, 4294901760
    %v682 = vsub.f32 %v680, %v681
    %v683 = vand.u32 %v682, 4294901760
    %684 = vmatpush.msra.mxu0 %v683
    %v685 = vand.u32 %v217, 4294901760
    %v686 = vsub.f32 %v217, %v685
    %v687 = vand.u32 %v686, 4294901760
    %v688 = vsub.f32 %v686, %v687
    %v689 = vand.u32 %v688, 4294901760
    %690 = vmatpush.msra.mxu0 %v689
    %v691 = vand.u32 %v217, 4294901760
    %v692 = vsub.f32 %v217, %v691
    %v693 = vand.u32 %v692, 4294901760
    %v694 = vsub.f32 %v692, %v693
    %v695 = vand.u32 %v694, 4294901760
    %696 = vmatpush.msra.mxu0 %v695
    %v697 = vand.u32 %v217, 4294901760
    %v698 = vsub.f32 %v217, %v697
    %v699 = vand.u32 %v698, 4294901760
    %v700 = vsub.f32 %v698, %v699
    %v701 = vand.u32 %v700, 4294901760
    %702 = vmatpush.msra.mxu0 %v701
    %v703 = vand.u32 %v218, 4294901760
    %704 = vmatmul.f32.gmra.mxu0 %v703
    %v705 = vpop.f32.mrf.mxu0
    %v706 = vadd.f32 %v605, %v705
    %707 = vdwg.mxu0
    %v708 = vand.u32 %v217, 4294901760
    %v709 = vsub.f32 %v217, %v708
    %710 = vmatpush.msra.mxu0 %v709
    %v711 = vand.u32 %v217, 4294901760
    %v712 = vsub.f32 %v217, %v711
    %713 = vmatpush.msra.mxu0 %v712
    %v714 = vand.u32 %v217, 4294901760
    %v715 = vsub.f32 %v217, %v714
    %716 = vmatpush.msra.mxu0 %v715
    %v717 = vand.u32 %v217, 4294901760
    %v718 = vsub.f32 %v217, %v717
    %719 = vmatpush.msra.mxu0 %v718
    %v720 = vand.u32 %v217, 4294901760
    %v721 = vsub.f32 %v217, %v720
    %722 = vmatpush.msra.mxu0 %v721
    %v723 = vand.u32 %v217, 4294901760
    %v724 = vsub.f32 %v217, %v723
    %725 = vmatpush.msra.mxu0 %v724
    %v726 = vand.u32 %v217, 4294901760
    %v727 = vsub.f32 %v217, %v726
    %728 = vmatpush.msra.mxu0 %v727
    %v729 = vand.u32 %v217, 4294901760
    %v730 = vsub.f32 %v217, %v729
    %731 = vmatpush.msra.mxu0 %v730
    %v732 = vand.u32 %v217, 4294901760
    %v733 = vsub.f32 %v217, %v732
    %734 = vmatpush.msra.mxu0 %v733
    %v735 = vand.u32 %v217, 4294901760
    %v736 = vsub.f32 %v217, %v735
    %737 = vmatpush.msra.mxu0 %v736
    %v738 = vand.u32 %v217, 4294901760
    %v739 = vsub.f32 %v217, %v738
    %740 = vmatpush.msra.mxu0 %v739
    %v741 = vand.u32 %v217, 4294901760
    %v742 = vsub.f32 %v217, %v741
    %743 = vmatpush.msra.mxu0 %v742
    %v744 = vand.u32 %v217, 4294901760
    %v745 = vsub.f32 %v217, %v744
    %746 = vmatpush.msra.mxu0 %v745
    %v747 = vand.u32 %v217, 4294901760
    %v748 = vsub.f32 %v217, %v747
    %749 = vmatpush.msra.mxu0 %v748
    %v750 = vand.u32 %v217, 4294901760
    %v751 = vsub.f32 %v217, %v750
    %752 = vmatpush.msra.mxu0 %v751
    %v753 = vand.u32 %v217, 4294901760
    %v754 = vsub.f32 %v217, %v753
    %755 = vmatpush.msra.mxu0 %v754
    %v756 = vand.u32 %v218, 4294901760
    %v757 = vsub.f32 %v218, %v756
    %758 = vmatmul.f32.gmra.mxu0 %v757
    %v759 = vpop.f32.mrf.mxu0
    %v760 = vadd.f32 %v706, %v759
    %761 = vdwg.mxu0
    %v762 = vand.u32 %v217, 4294901760
    %763 = vmatpush.msra.mxu0 %v762
    %v764 = vand.u32 %v217, 4294901760
    %765 = vmatpush.msra.mxu0 %v764
    %v766 = vand.u32 %v217, 4294901760
    %767 = vmatpush.msra.mxu0 %v766
    %v768 = vand.u32 %v217, 4294901760
    %769 = vmatpush.msra.mxu0 %v768
    %v770 = vand.u32 %v217, 4294901760
    %771 = vmatpush.msra.mxu0 %v770
    %v772 = vand.u32 %v217, 4294901760
    %773 = vmatpush.msra.mxu0 %v772
    %v774 = vand.u32 %v217, 4294901760
    %775 = vmatpush.msra.mxu0 %v774
    %v776 = vand.u32 %v217, 4294901760
    %777 = vmatpush.msra.mxu0 %v776
    %v778 = vand.u32 %v217, 4294901760
    %779 = vmatpush.msra.mxu0 %v778
    %v780 = vand.u32 %v217, 4294901760
    %781 = vmatpush.msra.mxu0 %v780
    %v782 = vand.u32 %v217, 4294901760
    %783 = vmatpush.msra.mxu0 %v782
    %v784 = vand.u32 %v217, 4294901760
    %785 = vmatpush.msra.mxu0 %v784
    %v786 = vand.u32 %v217, 4294901760
    %787 = vmatpush.msra.mxu0 %v786
    %v788 = vand.u32 %v217, 4294901760
    %789 = vmatpush.msra.mxu0 %v788
    %v790 = vand.u32 %v217, 4294901760
    %791 = vmatpush.msra.mxu0 %v790
    %v792 = vand.u32 %v217, 4294901760
    %793 = vmatpush.msra.mxu0 %v792
    %v794 = vand.u32 %v218, 4294901760
    %v795 = vsub.f32 %v218, %v794
    %v796 = vand.u32 %v795, 4294901760
    %797 = vmatmul.f32.gmra.mxu0 %v796
    %v798 = vpop.f32.mrf.mxu0
    %v799 = vadd.f32 %v760, %v798
    %800 = vdwg.mxu0
    %v801 = vand.u32 %v217, 4294901760
    %v802 = vsub.f32 %v217, %v801
    %v803 = vand.u32 %v802, 4294901760
    %804 = vmatpush.msra.mxu0 %v803
    %v805 = vand.u32 %v217, 4294901760
    %v806 = vsub.f32 %v217, %v805
    %v807 = vand.u32 %v806, 4294901760
    %808 = vmatpush.msra.mxu0 %v807
    %v809 = vand.u32 %v217, 4294901760
    %v810 = vsub.f32 %v217, %v809
    %v811 = vand.u32 %v810, 4294901760
    %812 = vmatpush.msra.mxu0 %v811
    %v813 = vand.u32 %v217, 4294901760
    %v814 = vsub.f32 %v217, %v813
    %v815 = vand.u32 %v814, 4294901760
    %816 = vmatpush.msra.mxu0 %v815
    %v817 = vand.u32 %v217, 4294901760
    %v818 = vsub.f32 %v217, %v817
    %v819 = vand.u32 %v818, 4294901760
    %820 = vmatpush.msra.mxu0 %v819
    %v821 = vand.u32 %v217, 4294901760
    %v822 = vsub.f32 %v217, %v821
    %v823 = vand.u32 %v822, 4294901760
    %824 = vmatpush.msra.mxu0 %v823
    %v825 = vand.u32 %v217, 4294901760
    %v826 = vsub.f32 %v217, %v825
    %v827 = vand.u32 %v826, 4294901760
    %828 = vmatpush.msra.mxu0 %v827
    %v829 = vand.u32 %v217, 4294901760
    %v830 = vsub.f32 %v217, %v829
    %v831 = vand.u32 %v830, 4294901760
    %832 = vmatpush.msra.mxu0 %v831
    %v833 = vand.u32 %v217, 4294901760
    %v834 = vsub.f32 %v217, %v833
    %v835 = vand.u32 %v834, 4294901760
    %836 = vmatpush.msra.mxu0 %v835
    %v837 = vand.u32 %v217, 4294901760
    %v838 = vsub.f32 %v217, %v837
    %v839 = vand.u32 %v838, 4294901760
    %840 = vmatpush.msra.mxu0 %v839
    %v841 = vand.u32 %v217, 4294901760
    %v842 = vsub.f32 %v217, %v841
    %v843 = vand.u32 %v842, 4294901760
    %844 = vmatpush.msra.mxu0 %v843
    %v845 = vand.u32 %v217, 4294901760
    %v846 = vsub.f32 %v217, %v845
    %v847 = vand.u32 %v846, 4294901760
    %848 = vmatpush.msra.mxu0 %v847
    %v849 = vand.u32 %v217, 4294901760
    %v850 = vsub.f32 %v217, %v849
    %v851 = vand.u32 %v850, 4294901760
    %852 = vmatpush.msra.mxu0 %v851
    %v853 = vand.u32 %v217, 4294901760
    %v854 = vsub.f32 %v217, %v853
    %v855 = vand.u32 %v854, 4294901760
    %856 = vmatpush.msra.mxu0 %v855
    %v857 = vand.u32 %v217, 4294901760
    %v858 = vsub.f32 %v217, %v857
    %v859 = vand.u32 %v858, 4294901760
    %860 = vmatpush.msra.mxu0 %v859
    %v861 = vand.u32 %v217, 4294901760
    %v862 = vsub.f32 %v217, %v861
    %v863 = vand.u32 %v862, 4294901760
    %864 = vmatpush.msra.mxu0 %v863
    %v865 = vand.u32 %v218, 4294901760
    %866 = vmatmul.f32.gmra.mxu0 %v865
    %v867 = vpop.f32.mrf.mxu0
    %v868 = vadd.f32 %v799, %v867
    %869 = vdwg.mxu0
    %v870 = vand.u32 %v217, 4294901760
    %871 = vmatpush.msra.mxu0 %v870
    %v872 = vand.u32 %v217, 4294901760
    %873 = vmatpush.msra.mxu0 %v872
    %v874 = vand.u32 %v217, 4294901760
    %875 = vmatpush.msra.mxu0 %v874
    %v876 = vand.u32 %v217, 4294901760
    %877 = vmatpush.msra.mxu0 %v876
    %v878 = vand.u32 %v217, 4294901760
    %879 = vmatpush.msra.mxu0 %v878
    %v880 = vand.u32 %v217, 4294901760
    %881 = vmatpush.msra.mxu0 %v880
    %v882 = vand.u32 %v217, 4294901760
    %883 = vmatpush.msra.mxu0 %v882
    %v884 = vand.u32 %v217, 4294901760
    %885 = vmatpush.msra.mxu0 %v884
    %v886 = vand.u32 %v217, 4294901760
    %887 = vmatpush.msra.mxu0 %v886
    %v888 = vand.u32 %v217, 4294901760
    %889 = vmatpush.msra.mxu0 %v888
    %v890 = vand.u32 %v217, 4294901760
    %891 = vmatpush.msra.mxu0 %v890
    %v892 = vand.u32 %v217, 4294901760
    %893 = vmatpush.msra.mxu0 %v892
    %v894 = vand.u32 %v217, 4294901760
    %895 = vmatpush.msra.mxu0 %v894
    %v896 = vand.u32 %v217, 4294901760
    %897 = vmatpush.msra.mxu0 %v896
    %v898 = vand.u32 %v217, 4294901760
    %899 = vmatpush.msra.mxu0 %v898
    %v900 = vand.u32 %v217, 4294901760
    %901 = vmatpush.msra.mxu0 %v900
    %v902 = vand.u32 %v218, 4294901760
    %903 = vmatmul.f32.gmra.mxu0 %v902
    %v904 = vpop.f32.mrf.mxu0
    %v905 = vadd.f32 %v868, %v904
    %906 = vdwg.mxu0
    %v907 = vperm.slane %v60, 2
    %v908 = vsub.f32 %v209, %v907
    %vm909 = vcmp.eq.s32.totalorder %v212, 2
    %v910 = vsel %vm909, 1, 0
    %v911 = vcvt.s32.f32 %v910
    %v912 = vmul.f32 %v908, %v908
    %v913 = vand.u32 %v911, 4294901760
    %914 = vmatpush.msra.mxu0 %v913
    %v915 = vand.u32 %v911, 4294901760
    %916 = vmatpush.msra.mxu0 %v915
    %v917 = vand.u32 %v911, 4294901760
    %918 = vmatpush.msra.mxu0 %v917
    %v919 = vand.u32 %v911, 4294901760
    %920 = vmatpush.msra.mxu0 %v919
    %v921 = vand.u32 %v911, 4294901760
    %922 = vmatpush.msra.mxu0 %v921
    %v923 = vand.u32 %v911, 4294901760
    %924 = vmatpush.msra.mxu0 %v923
    %v925 = vand.u32 %v911, 4294901760
    %926 = vmatpush.msra.mxu0 %v925
    %v927 = vand.u32 %v911, 4294901760
    %928 = vmatpush.msra.mxu0 %v927
    %v929 = vand.u32 %v911, 4294901760
    %930 = vmatpush.msra.mxu0 %v929
    %v931 = vand.u32 %v911, 4294901760
    %932 = vmatpush.msra.mxu0 %v931
    %v933 = vand.u32 %v911, 4294901760
    %934 = vmatpush.msra.mxu0 %v933
    %v935 = vand.u32 %v911, 4294901760
    %936 = vmatpush.msra.mxu0 %v935
    %v937 = vand.u32 %v911, 4294901760
    %938 = vmatpush.msra.mxu0 %v937
    %v939 = vand.u32 %v911, 4294901760
    %940 = vmatpush.msra.mxu0 %v939
    %v941 = vand.u32 %v911, 4294901760
    %942 = vmatpush.msra.mxu0 %v941
    %v943 = vand.u32 %v911, 4294901760
    %944 = vmatpush.msra.mxu0 %v943
    %v945 = vand.u32 %v912, 4294901760
    %v946 = vsub.f32 %v912, %v945
    %v947 = vand.u32 %v946, 4294901760
    %v948 = vsub.f32 %v946, %v947
    %v949 = vand.u32 %v948, 4294901760
    %950 = vmatmul.f32.gmra.mxu0 %v949
    %v951 = vpop.f32.mrf.mxu0
    %v952 = vadd.f32 0.0, %v951
    %953 = vdwg.mxu0
    %v954 = vand.u32 %v911, 4294901760
    %v955 = vsub.f32 %v911, %v954
    %v956 = vand.u32 %v955, 4294901760
    %v957 = vsub.f32 %v955, %v956
    %v958 = vand.u32 %v957, 4294901760
    %959 = vmatpush.msra.mxu0 %v958
    %v960 = vand.u32 %v911, 4294901760
    %v961 = vsub.f32 %v911, %v960
    %v962 = vand.u32 %v961, 4294901760
    %v963 = vsub.f32 %v961, %v962
    %v964 = vand.u32 %v963, 4294901760
    %965 = vmatpush.msra.mxu0 %v964
    %v966 = vand.u32 %v911, 4294901760
    %v967 = vsub.f32 %v911, %v966
    %v968 = vand.u32 %v967, 4294901760
    %v969 = vsub.f32 %v967, %v968
    %v970 = vand.u32 %v969, 4294901760
    %971 = vmatpush.msra.mxu0 %v970
    %v972 = vand.u32 %v911, 4294901760
    %v973 = vsub.f32 %v911, %v972
    %v974 = vand.u32 %v973, 4294901760
    %v975 = vsub.f32 %v973, %v974
    %v976 = vand.u32 %v975, 4294901760
    %977 = vmatpush.msra.mxu0 %v976
    %v978 = vand.u32 %v911, 4294901760
    %v979 = vsub.f32 %v911, %v978
    %v980 = vand.u32 %v979, 4294901760
    %v981 = vsub.f32 %v979, %v980
    %v982 = vand.u32 %v981, 4294901760
    %983 = vmatpush.msra.mxu0 %v982
    %v984 = vand.u32 %v911, 4294901760
    %v985 = vsub.f32 %v911, %v984
    %v986 = vand.u32 %v985, 4294901760
    %v987 = vsub.f32 %v985, %v986
    %v988 = vand.u32 %v987, 4294901760
    %989 = vmatpush.msra.mxu0 %v988
    %v990 = vand.u32 %v911, 4294901760
    %v991 = vsub.f32 %v911, %v990
    %v992 = vand.u32 %v991, 4294901760
    %v993 = vsub.f32 %v991, %v992
    %v994 = vand.u32 %v993, 4294901760
    %995 = vmatpush.msra.mxu0 %v994
    %v996 = vand.u32 %v911, 4294901760
    %v997 = vsub.f32 %v911, %v996
    %v998 = vand.u32 %v997, 4294901760
    %v999 = vsub.f32 %v997, %v998
    %v1000 = vand.u32 %v999, 4294901760
    %1001 = vmatpush.msra.mxu0 %v1000
    %v1002 = vand.u32 %v911, 4294901760
    %v1003 = vsub.f32 %v911, %v1002
    %v1004 = vand.u32 %v1003, 4294901760
    %v1005 = vsub.f32 %v1003, %v1004
    %v1006 = vand.u32 %v1005, 4294901760
    %1007 = vmatpush.msra.mxu0 %v1006
    %v1008 = vand.u32 %v911, 4294901760
    %v1009 = vsub.f32 %v911, %v1008
    %v1010 = vand.u32 %v1009, 4294901760
    %v1011 = vsub.f32 %v1009, %v1010
    %v1012 = vand.u32 %v1011, 4294901760
    %1013 = vmatpush.msra.mxu0 %v1012
    %v1014 = vand.u32 %v911, 4294901760
    %v1015 = vsub.f32 %v911, %v1014
    %v1016 = vand.u32 %v1015, 4294901760
    %v1017 = vsub.f32 %v1015, %v1016
    %v1018 = vand.u32 %v1017, 4294901760
    %1019 = vmatpush.msra.mxu0 %v1018
    %v1020 = vand.u32 %v911, 4294901760
    %v1021 = vsub.f32 %v911, %v1020
    %v1022 = vand.u32 %v1021, 4294901760
    %v1023 = vsub.f32 %v1021, %v1022
    %v1024 = vand.u32 %v1023, 4294901760
    %1025 = vmatpush.msra.mxu0 %v1024
    %v1026 = vand.u32 %v911, 4294901760
    %v1027 = vsub.f32 %v911, %v1026
    %v1028 = vand.u32 %v1027, 4294901760
    %v1029 = vsub.f32 %v1027, %v1028
    %v1030 = vand.u32 %v1029, 4294901760
    %1031 = vmatpush.msra.mxu0 %v1030
    %v1032 = vand.u32 %v911, 4294901760
    %v1033 = vsub.f32 %v911, %v1032
    %v1034 = vand.u32 %v1033, 4294901760
    %v1035 = vsub.f32 %v1033, %v1034
    %v1036 = vand.u32 %v1035, 4294901760
    %1037 = vmatpush.msra.mxu0 %v1036
    %v1038 = vand.u32 %v911, 4294901760
    %v1039 = vsub.f32 %v911, %v1038
    %v1040 = vand.u32 %v1039, 4294901760
    %v1041 = vsub.f32 %v1039, %v1040
    %v1042 = vand.u32 %v1041, 4294901760
    %1043 = vmatpush.msra.mxu0 %v1042
    %v1044 = vand.u32 %v911, 4294901760
    %v1045 = vsub.f32 %v911, %v1044
    %v1046 = vand.u32 %v1045, 4294901760
    %v1047 = vsub.f32 %v1045, %v1046
    %v1048 = vand.u32 %v1047, 4294901760
    %1049 = vmatpush.msra.mxu0 %v1048
    %v1050 = vand.u32 %v912, 4294901760
    %1051 = vmatmul.f32.gmra.mxu0 %v1050
    %v1052 = vpop.f32.mrf.mxu0
    %v1053 = vadd.f32 %v952, %v1052
    %1054 = vdwg.mxu0
    %v1055 = vand.u32 %v911, 4294901760
    %v1056 = vsub.f32 %v911, %v1055
    %1057 = vmatpush.msra.mxu0 %v1056
    %v1058 = vand.u32 %v911, 4294901760
    %v1059 = vsub.f32 %v911, %v1058
    %1060 = vmatpush.msra.mxu0 %v1059
    %v1061 = vand.u32 %v911, 4294901760
    %v1062 = vsub.f32 %v911, %v1061
    %1063 = vmatpush.msra.mxu0 %v1062
    %v1064 = vand.u32 %v911, 4294901760
    %v1065 = vsub.f32 %v911, %v1064
    %1066 = vmatpush.msra.mxu0 %v1065
    %v1067 = vand.u32 %v911, 4294901760
    %v1068 = vsub.f32 %v911, %v1067
    %1069 = vmatpush.msra.mxu0 %v1068
    %v1070 = vand.u32 %v911, 4294901760
    %v1071 = vsub.f32 %v911, %v1070
    %1072 = vmatpush.msra.mxu0 %v1071
    %v1073 = vand.u32 %v911, 4294901760
    %v1074 = vsub.f32 %v911, %v1073
    %1075 = vmatpush.msra.mxu0 %v1074
    %v1076 = vand.u32 %v911, 4294901760
    %v1077 = vsub.f32 %v911, %v1076
    %1078 = vmatpush.msra.mxu0 %v1077
    %v1079 = vand.u32 %v911, 4294901760
    %v1080 = vsub.f32 %v911, %v1079
    %1081 = vmatpush.msra.mxu0 %v1080
    %v1082 = vand.u32 %v911, 4294901760
    %v1083 = vsub.f32 %v911, %v1082
    %1084 = vmatpush.msra.mxu0 %v1083
    %v1085 = vand.u32 %v911, 4294901760
    %v1086 = vsub.f32 %v911, %v1085
    %1087 = vmatpush.msra.mxu0 %v1086
    %v1088 = vand.u32 %v911, 4294901760
    %v1089 = vsub.f32 %v911, %v1088
    %1090 = vmatpush.msra.mxu0 %v1089
    %v1091 = vand.u32 %v911, 4294901760
    %v1092 = vsub.f32 %v911, %v1091
    %1093 = vmatpush.msra.mxu0 %v1092
    %v1094 = vand.u32 %v911, 4294901760
    %v1095 = vsub.f32 %v911, %v1094
    %1096 = vmatpush.msra.mxu0 %v1095
    %v1097 = vand.u32 %v911, 4294901760
    %v1098 = vsub.f32 %v911, %v1097
    %1099 = vmatpush.msra.mxu0 %v1098
    %v1100 = vand.u32 %v911, 4294901760
    %v1101 = vsub.f32 %v911, %v1100
    %1102 = vmatpush.msra.mxu0 %v1101
    %v1103 = vand.u32 %v912, 4294901760
    %v1104 = vsub.f32 %v912, %v1103
    %1105 = vmatmul.f32.gmra.mxu0 %v1104
    %v1106 = vpop.f32.mrf.mxu0
    %v1107 = vadd.f32 %v1053, %v1106
    %1108 = vdwg.mxu0
    %v1109 = vand.u32 %v911, 4294901760
    %1110 = vmatpush.msra.mxu0 %v1109
    %v1111 = vand.u32 %v911, 4294901760
    %1112 = vmatpush.msra.mxu0 %v1111
    %v1113 = vand.u32 %v911, 4294901760
    %1114 = vmatpush.msra.mxu0 %v1113
    %v1115 = vand.u32 %v911, 4294901760
    %1116 = vmatpush.msra.mxu0 %v1115
    %v1117 = vand.u32 %v911, 4294901760
    %1118 = vmatpush.msra.mxu0 %v1117
    %v1119 = vand.u32 %v911, 4294901760
    %1120 = vmatpush.msra.mxu0 %v1119
    %v1121 = vand.u32 %v911, 4294901760
    %1122 = vmatpush.msra.mxu0 %v1121
    %v1123 = vand.u32 %v911, 4294901760
    %1124 = vmatpush.msra.mxu0 %v1123
    %v1125 = vand.u32 %v911, 4294901760
    %1126 = vmatpush.msra.mxu0 %v1125
    %v1127 = vand.u32 %v911, 4294901760
    %1128 = vmatpush.msra.mxu0 %v1127
    %v1129 = vand.u32 %v911, 4294901760
    %1130 = vmatpush.msra.mxu0 %v1129
    %v1131 = vand.u32 %v911, 4294901760
    %1132 = vmatpush.msra.mxu0 %v1131
    %v1133 = vand.u32 %v911, 4294901760
    %1134 = vmatpush.msra.mxu0 %v1133
    %v1135 = vand.u32 %v911, 4294901760
    %1136 = vmatpush.msra.mxu0 %v1135
    %v1137 = vand.u32 %v911, 4294901760
    %1138 = vmatpush.msra.mxu0 %v1137
    %v1139 = vand.u32 %v911, 4294901760
    %1140 = vmatpush.msra.mxu0 %v1139
    %v1141 = vand.u32 %v912, 4294901760
    %v1142 = vsub.f32 %v912, %v1141
    %v1143 = vand.u32 %v1142, 4294901760
    %1144 = vmatmul.f32.gmra.mxu0 %v1143
    %v1145 = vpop.f32.mrf.mxu0
    %v1146 = vadd.f32 %v1107, %v1145
    %1147 = vdwg.mxu0
    %v1148 = vand.u32 %v911, 4294901760
    %v1149 = vsub.f32 %v911, %v1148
    %v1150 = vand.u32 %v1149, 4294901760
    %1151 = vmatpush.msra.mxu0 %v1150
    %v1152 = vand.u32 %v911, 4294901760
    %v1153 = vsub.f32 %v911, %v1152
    %v1154 = vand.u32 %v1153, 4294901760
    %1155 = vmatpush.msra.mxu0 %v1154
    %v1156 = vand.u32 %v911, 4294901760
    %v1157 = vsub.f32 %v911, %v1156
    %v1158 = vand.u32 %v1157, 4294901760
    %1159 = vmatpush.msra.mxu0 %v1158
    %v1160 = vand.u32 %v911, 4294901760
    %v1161 = vsub.f32 %v911, %v1160
    %v1162 = vand.u32 %v1161, 4294901760
    %1163 = vmatpush.msra.mxu0 %v1162
    %v1164 = vand.u32 %v911, 4294901760
    %v1165 = vsub.f32 %v911, %v1164
    %v1166 = vand.u32 %v1165, 4294901760
    %1167 = vmatpush.msra.mxu0 %v1166
    %v1168 = vand.u32 %v911, 4294901760
    %v1169 = vsub.f32 %v911, %v1168
    %v1170 = vand.u32 %v1169, 4294901760
    %1171 = vmatpush.msra.mxu0 %v1170
    %v1172 = vand.u32 %v911, 4294901760
    %v1173 = vsub.f32 %v911, %v1172
    %v1174 = vand.u32 %v1173, 4294901760
    %1175 = vmatpush.msra.mxu0 %v1174
    %v1176 = vand.u32 %v911, 4294901760
    %v1177 = vsub.f32 %v911, %v1176
    %v1178 = vand.u32 %v1177, 4294901760
    %1179 = vmatpush.msra.mxu0 %v1178
    %v1180 = vand.u32 %v911, 4294901760
    %v1181 = vsub.f32 %v911, %v1180
    %v1182 = vand.u32 %v1181, 4294901760
    %1183 = vmatpush.msra.mxu0 %v1182
    %v1184 = vand.u32 %v911, 4294901760
    %v1185 = vsub.f32 %v911, %v1184
    %v1186 = vand.u32 %v1185, 4294901760
    %1187 = vmatpush.msra.mxu0 %v1186
    %v1188 = vand.u32 %v911, 4294901760
    %v1189 = vsub.f32 %v911, %v1188
    %v1190 = vand.u32 %v1189, 4294901760
    %1191 = vmatpush.msra.mxu0 %v1190
    %v1192 = vand.u32 %v911, 4294901760
    %v1193 = vsub.f32 %v911, %v1192
    %v1194 = vand.u32 %v1193, 4294901760
    %1195 = vmatpush.msra.mxu0 %v1194
    %v1196 = vand.u32 %v911, 4294901760
    %v1197 = vsub.f32 %v911, %v1196
    %v1198 = vand.u32 %v1197, 4294901760
    %1199 = vmatpush.msra.mxu0 %v1198
    %v1200 = vand.u32 %v911, 4294901760
    %v1201 = vsub.f32 %v911, %v1200
    %v1202 = vand.u32 %v1201, 4294901760
    %1203 = vmatpush.msra.mxu0 %v1202
    %v1204 = vand.u32 %v911, 4294901760
    %v1205 = vsub.f32 %v911, %v1204
    %v1206 = vand.u32 %v1205, 4294901760
    %1207 = vmatpush.msra.mxu0 %v1206
    %v1208 = vand.u32 %v911, 4294901760
    %v1209 = vsub.f32 %v911, %v1208
    %v1210 = vand.u32 %v1209, 4294901760
    %1211 = vmatpush.msra.mxu0 %v1210
    %v1212 = vand.u32 %v912, 4294901760
    %1213 = vmatmul.f32.gmra.mxu0 %v1212
    %v1214 = vpop.f32.mrf.mxu0
    %v1215 = vadd.f32 %v1146, %v1214
    %1216 = vdwg.mxu0
    %v1217 = vand.u32 %v911, 4294901760
    %1218 = vmatpush.msra.mxu0 %v1217
    %v1219 = vand.u32 %v911, 4294901760
    %1220 = vmatpush.msra.mxu0 %v1219
    %v1221 = vand.u32 %v911, 4294901760
    %1222 = vmatpush.msra.mxu0 %v1221
    %v1223 = vand.u32 %v911, 4294901760
    %1224 = vmatpush.msra.mxu0 %v1223
    %v1225 = vand.u32 %v911, 4294901760
    %1226 = vmatpush.msra.mxu0 %v1225
    %v1227 = vand.u32 %v911, 4294901760
    %1228 = vmatpush.msra.mxu0 %v1227
    %v1229 = vand.u32 %v911, 4294901760
    %1230 = vmatpush.msra.mxu0 %v1229
    %v1231 = vand.u32 %v911, 4294901760
    %1232 = vmatpush.msra.mxu0 %v1231
    %v1233 = vand.u32 %v911, 4294901760
    %1234 = vmatpush.msra.mxu0 %v1233
    %v1235 = vand.u32 %v911, 4294901760
    %1236 = vmatpush.msra.mxu0 %v1235
    %v1237 = vand.u32 %v911, 4294901760
    %1238 = vmatpush.msra.mxu0 %v1237
    %v1239 = vand.u32 %v911, 4294901760
    %1240 = vmatpush.msra.mxu0 %v1239
    %v1241 = vand.u32 %v911, 4294901760
    %1242 = vmatpush.msra.mxu0 %v1241
    %v1243 = vand.u32 %v911, 4294901760
    %1244 = vmatpush.msra.mxu0 %v1243
    %v1245 = vand.u32 %v911, 4294901760
    %1246 = vmatpush.msra.mxu0 %v1245
    %v1247 = vand.u32 %v911, 4294901760
    %1248 = vmatpush.msra.mxu0 %v1247
    %v1249 = vand.u32 %v912, 4294901760
    %1250 = vmatmul.f32.gmra.mxu0 %v1249
    %v1251 = vpop.f32.mrf.mxu0
    %v1252 = vadd.f32 %v1215, %v1251
    %1253 = vdwg.mxu0
    %v1254 = vadd.f32 %v905, %v1252
    %v1255 = vperm.slane %v60, 3
    %v1256 = vsub.f32 %v209, %v1255
    %vm1257 = vcmp.eq.s32.totalorder %v212, 3
    %v1258 = vsel %vm1257, 1, 0
    %v1259 = vcvt.s32.f32 %v1258
    %v1260 = vmul.f32 %v1256, %v1256
    %v1261 = vand.u32 %v1259, 4294901760
    %1262 = vmatpush.msra.mxu0 %v1261
    %v1263 = vand.u32 %v1259, 4294901760
    %1264 = vmatpush.msra.mxu0 %v1263
    %v1265 = vand.u32 %v1259, 4294901760
    %1266 = vmatpush.msra.mxu0 %v1265
    %v1267 = vand.u32 %v1259, 4294901760
    %1268 = vmatpush.msra.mxu0 %v1267
    %v1269 = vand.u32 %v1259, 4294901760
    %1270 = vmatpush.msra.mxu0 %v1269
    %v1271 = vand.u32 %v1259, 4294901760
    %1272 = vmatpush.msra.mxu0 %v1271
    %v1273 = vand.u32 %v1259, 4294901760
    %1274 = vmatpush.msra.mxu0 %v1273
    %v1275 = vand.u32 %v1259, 4294901760
    %1276 = vmatpush.msra.mxu0 %v1275
    %v1277 = vand.u32 %v1259, 4294901760
    %1278 = vmatpush.msra.mxu0 %v1277
    %v1279 = vand.u32 %v1259, 4294901760
    %1280 = vmatpush.msra.mxu0 %v1279
    %v1281 = vand.u32 %v1259, 4294901760
    %1282 = vmatpush.msra.mxu0 %v1281
    %v1283 = vand.u32 %v1259, 4294901760
    %1284 = vmatpush.msra.mxu0 %v1283
    %v1285 = vand.u32 %v1259, 4294901760
    %1286 = vmatpush.msra.mxu0 %v1285
    %v1287 = vand.u32 %v1259, 4294901760
    %1288 = vmatpush.msra.mxu0 %v1287
    %v1289 = vand.u32 %v1259, 4294901760
    %1290 = vmatpush.msra.mxu0 %v1289
    %v1291 = vand.u32 %v1259, 4294901760
    %1292 = vmatpush.msra.mxu0 %v1291
    %v1293 = vand.u32 %v1260, 4294901760
    %v1294 = vsub.f32 %v1260, %v1293
    %v1295 = vand.u32 %v1294, 4294901760
    %v1296 = vsub.f32 %v1294, %v1295
    %v1297 = vand.u32 %v1296, 4294901760
    %1298 = vmatmul.f32.gmra.mxu0 %v1297
    %v1299 = vpop.f32.mrf.mxu0
    %v1300 = vadd.f32 0.0, %v1299
    %1301 = vdwg.mxu0
    %v1302 = vand.u32 %v1259, 4294901760
    %v1303 = vsub.f32 %v1259, %v1302
    %v1304 = vand.u32 %v1303, 4294901760
    %v1305 = vsub.f32 %v1303, %v1304
    %v1306 = vand.u32 %v1305, 4294901760
    %1307 = vmatpush.msra.mxu0 %v1306
    %v1308 = vand.u32 %v1259, 4294901760
    %v1309 = vsub.f32 %v1259, %v1308
    %v1310 = vand.u32 %v1309, 4294901760
    %v1311 = vsub.f32 %v1309, %v1310
    %v1312 = vand.u32 %v1311, 4294901760
    %1313 = vmatpush.msra.mxu0 %v1312
    %v1314 = vand.u32 %v1259, 4294901760
    %v1315 = vsub.f32 %v1259, %v1314
    %v1316 = vand.u32 %v1315, 4294901760
    %v1317 = vsub.f32 %v1315, %v1316
    %v1318 = vand.u32 %v1317, 4294901760
    %1319 = vmatpush.msra.mxu0 %v1318
    %v1320 = vand.u32 %v1259, 4294901760
    %v1321 = vsub.f32 %v1259, %v1320
    %v1322 = vand.u32 %v1321, 4294901760
    %v1323 = vsub.f32 %v1321, %v1322
    %v1324 = vand.u32 %v1323, 4294901760
    %1325 = vmatpush.msra.mxu0 %v1324
    %v1326 = vand.u32 %v1259, 4294901760
    %v1327 = vsub.f32 %v1259, %v1326
    %v1328 = vand.u32 %v1327, 4294901760
    %v1329 = vsub.f32 %v1327, %v1328
    %v1330 = vand.u32 %v1329, 4294901760
    %1331 = vmatpush.msra.mxu0 %v1330
    %v1332 = vand.u32 %v1259, 4294901760
    %v1333 = vsub.f32 %v1259, %v1332
    %v1334 = vand.u32 %v1333, 4294901760
    %v1335 = vsub.f32 %v1333, %v1334
    %v1336 = vand.u32 %v1335, 4294901760
    %1337 = vmatpush.msra.mxu0 %v1336
    %v1338 = vand.u32 %v1259, 4294901760
    %v1339 = vsub.f32 %v1259, %v1338
    %v1340 = vand.u32 %v1339, 4294901760
    %v1341 = vsub.f32 %v1339, %v1340
    %v1342 = vand.u32 %v1341, 4294901760
    %1343 = vmatpush.msra.mxu0 %v1342
    %v1344 = vand.u32 %v1259, 4294901760
    %v1345 = vsub.f32 %v1259, %v1344
    %v1346 = vand.u32 %v1345, 4294901760
    %v1347 = vsub.f32 %v1345, %v1346
    %v1348 = vand.u32 %v1347, 4294901760
    %1349 = vmatpush.msra.mxu0 %v1348
    %v1350 = vand.u32 %v1259, 4294901760
    %v1351 = vsub.f32 %v1259, %v1350
    %v1352 = vand.u32 %v1351, 4294901760
    %v1353 = vsub.f32 %v1351, %v1352
    %v1354 = vand.u32 %v1353, 4294901760
    %1355 = vmatpush.msra.mxu0 %v1354
    %v1356 = vand.u32 %v1259, 4294901760
    %v1357 = vsub.f32 %v1259, %v1356
    %v1358 = vand.u32 %v1357, 4294901760
    %v1359 = vsub.f32 %v1357, %v1358
    %v1360 = vand.u32 %v1359, 4294901760
    %1361 = vmatpush.msra.mxu0 %v1360
    %v1362 = vand.u32 %v1259, 4294901760
    %v1363 = vsub.f32 %v1259, %v1362
    %v1364 = vand.u32 %v1363, 4294901760
    %v1365 = vsub.f32 %v1363, %v1364
    %v1366 = vand.u32 %v1365, 4294901760
    %1367 = vmatpush.msra.mxu0 %v1366
    %v1368 = vand.u32 %v1259, 4294901760
    %v1369 = vsub.f32 %v1259, %v1368
    %v1370 = vand.u32 %v1369, 4294901760
    %v1371 = vsub.f32 %v1369, %v1370
    %v1372 = vand.u32 %v1371, 4294901760
    %1373 = vmatpush.msra.mxu0 %v1372
    %v1374 = vand.u32 %v1259, 4294901760
    %v1375 = vsub.f32 %v1259, %v1374
    %v1376 = vand.u32 %v1375, 4294901760
    %v1377 = vsub.f32 %v1375, %v1376
    %v1378 = vand.u32 %v1377, 4294901760
    %1379 = vmatpush.msra.mxu0 %v1378
    %v1380 = vand.u32 %v1259, 4294901760
    %v1381 = vsub.f32 %v1259, %v1380
    %v1382 = vand.u32 %v1381, 4294901760
    %v1383 = vsub.f32 %v1381, %v1382
    %v1384 = vand.u32 %v1383, 4294901760
    %1385 = vmatpush.msra.mxu0 %v1384
    %v1386 = vand.u32 %v1259, 4294901760
    %v1387 = vsub.f32 %v1259, %v1386
    %v1388 = vand.u32 %v1387, 4294901760
    %v1389 = vsub.f32 %v1387, %v1388
    %v1390 = vand.u32 %v1389, 4294901760
    %1391 = vmatpush.msra.mxu0 %v1390
    %v1392 = vand.u32 %v1259, 4294901760
    %v1393 = vsub.f32 %v1259, %v1392
    %v1394 = vand.u32 %v1393, 4294901760
    %v1395 = vsub.f32 %v1393, %v1394
    %v1396 = vand.u32 %v1395, 4294901760
    %1397 = vmatpush.msra.mxu0 %v1396
    %v1398 = vand.u32 %v1260, 4294901760
    %1399 = vmatmul.f32.gmra.mxu0 %v1398
    %v1400 = vpop.f32.mrf.mxu0
    %v1401 = vadd.f32 %v1300, %v1400
    %1402 = vdwg.mxu0
    %v1403 = vand.u32 %v1259, 4294901760
    %v1404 = vsub.f32 %v1259, %v1403
    %1405 = vmatpush.msra.mxu0 %v1404
    %v1406 = vand.u32 %v1259, 4294901760
    %v1407 = vsub.f32 %v1259, %v1406
    %1408 = vmatpush.msra.mxu0 %v1407
    %v1409 = vand.u32 %v1259, 4294901760
    %v1410 = vsub.f32 %v1259, %v1409
    %1411 = vmatpush.msra.mxu0 %v1410
    %v1412 = vand.u32 %v1259, 4294901760
    %v1413 = vsub.f32 %v1259, %v1412
    %1414 = vmatpush.msra.mxu0 %v1413
    %v1415 = vand.u32 %v1259, 4294901760
    %v1416 = vsub.f32 %v1259, %v1415
    %1417 = vmatpush.msra.mxu0 %v1416
    %v1418 = vand.u32 %v1259, 4294901760
    %v1419 = vsub.f32 %v1259, %v1418
    %1420 = vmatpush.msra.mxu0 %v1419
    %v1421 = vand.u32 %v1259, 4294901760
    %v1422 = vsub.f32 %v1259, %v1421
    %1423 = vmatpush.msra.mxu0 %v1422
    %v1424 = vand.u32 %v1259, 4294901760
    %v1425 = vsub.f32 %v1259, %v1424
    %1426 = vmatpush.msra.mxu0 %v1425
    %v1427 = vand.u32 %v1259, 4294901760
    %v1428 = vsub.f32 %v1259, %v1427
    %1429 = vmatpush.msra.mxu0 %v1428
    %v1430 = vand.u32 %v1259, 4294901760
    %v1431 = vsub.f32 %v1259, %v1430
    %1432 = vmatpush.msra.mxu0 %v1431
    %v1433 = vand.u32 %v1259, 4294901760
    %v1434 = vsub.f32 %v1259, %v1433
    %1435 = vmatpush.msra.mxu0 %v1434
    %v1436 = vand.u32 %v1259, 4294901760
    %v1437 = vsub.f32 %v1259, %v1436
    %1438 = vmatpush.msra.mxu0 %v1437
    %v1439 = vand.u32 %v1259, 4294901760
    %v1440 = vsub.f32 %v1259, %v1439
    %1441 = vmatpush.msra.mxu0 %v1440
    %v1442 = vand.u32 %v1259, 4294901760
    %v1443 = vsub.f32 %v1259, %v1442
    %1444 = vmatpush.msra.mxu0 %v1443
    %v1445 = vand.u32 %v1259, 4294901760
    %v1446 = vsub.f32 %v1259, %v1445
    %1447 = vmatpush.msra.mxu0 %v1446
    %v1448 = vand.u32 %v1259, 4294901760
    %v1449 = vsub.f32 %v1259, %v1448
    %1450 = vmatpush.msra.mxu0 %v1449
    %v1451 = vand.u32 %v1260, 4294901760
    %v1452 = vsub.f32 %v1260, %v1451
    %1453 = vmatmul.f32.gmra.mxu0 %v1452
    %v1454 = vpop.f32.mrf.mxu0
    %v1455 = vadd.f32 %v1401, %v1454
    %1456 = vdwg.mxu0
    %v1457 = vand.u32 %v1259, 4294901760
    %1458 = vmatpush.msra.mxu0 %v1457
    %v1459 = vand.u32 %v1259, 4294901760
    %1460 = vmatpush.msra.mxu0 %v1459
    %v1461 = vand.u32 %v1259, 4294901760
    %1462 = vmatpush.msra.mxu0 %v1461
    %v1463 = vand.u32 %v1259, 4294901760
    %1464 = vmatpush.msra.mxu0 %v1463
    %v1465 = vand.u32 %v1259, 4294901760
    %1466 = vmatpush.msra.mxu0 %v1465
    %v1467 = vand.u32 %v1259, 4294901760
    %1468 = vmatpush.msra.mxu0 %v1467
    %v1469 = vand.u32 %v1259, 4294901760
    %1470 = vmatpush.msra.mxu0 %v1469
    %v1471 = vand.u32 %v1259, 4294901760
    %1472 = vmatpush.msra.mxu0 %v1471
    %v1473 = vand.u32 %v1259, 4294901760
    %1474 = vmatpush.msra.mxu0 %v1473
    %v1475 = vand.u32 %v1259, 4294901760
    %1476 = vmatpush.msra.mxu0 %v1475
    %v1477 = vand.u32 %v1259, 4294901760
    %1478 = vmatpush.msra.mxu0 %v1477
    %v1479 = vand.u32 %v1259, 4294901760
    %1480 = vmatpush.msra.mxu0 %v1479
    %v1481 = vand.u32 %v1259, 4294901760
    %1482 = vmatpush.msra.mxu0 %v1481
    %v1483 = vand.u32 %v1259, 4294901760
    %1484 = vmatpush.msra.mxu0 %v1483
    %v1485 = vand.u32 %v1259, 4294901760
    %1486 = vmatpush.msra.mxu0 %v1485
    %v1487 = vand.u32 %v1259, 4294901760
    %1488 = vmatpush.msra.mxu0 %v1487
    %v1489 = vand.u32 %v1260, 4294901760
    %v1490 = vsub.f32 %v1260, %v1489
    %v1491 = vand.u32 %v1490, 4294901760
    %1492 = vmatmul.f32.gmra.mxu0 %v1491
    %v1493 = vpop.f32.mrf.mxu0
    %v1494 = vadd.f32 %v1455, %v1493
    %1495 = vdwg.mxu0
    %v1496 = vand.u32 %v1259, 4294901760
    %v1497 = vsub.f32 %v1259, %v1496
    %v1498 = vand.u32 %v1497, 4294901760
    %1499 = vmatpush.msra.mxu0 %v1498
    %v1500 = vand.u32 %v1259, 4294901760
    %v1501 = vsub.f32 %v1259, %v1500
    %v1502 = vand.u32 %v1501, 4294901760
    %1503 = vmatpush.msra.mxu0 %v1502
    %v1504 = vand.u32 %v1259, 4294901760
    %v1505 = vsub.f32 %v1259, %v1504
    %v1506 = vand.u32 %v1505, 4294901760
    %1507 = vmatpush.msra.mxu0 %v1506
    %v1508 = vand.u32 %v1259, 4294901760
    %v1509 = vsub.f32 %v1259, %v1508
    %v1510 = vand.u32 %v1509, 4294901760
    %1511 = vmatpush.msra.mxu0 %v1510
    %v1512 = vand.u32 %v1259, 4294901760
    %v1513 = vsub.f32 %v1259, %v1512
    %v1514 = vand.u32 %v1513, 4294901760
    %1515 = vmatpush.msra.mxu0 %v1514
    %v1516 = vand.u32 %v1259, 4294901760
    %v1517 = vsub.f32 %v1259, %v1516
    %v1518 = vand.u32 %v1517, 4294901760
    %1519 = vmatpush.msra.mxu0 %v1518
    %v1520 = vand.u32 %v1259, 4294901760
    %v1521 = vsub.f32 %v1259, %v1520
    %v1522 = vand.u32 %v1521, 4294901760
    %1523 = vmatpush.msra.mxu0 %v1522
    %v1524 = vand.u32 %v1259, 4294901760
    %v1525 = vsub.f32 %v1259, %v1524
    %v1526 = vand.u32 %v1525, 4294901760
    %1527 = vmatpush.msra.mxu0 %v1526
    %v1528 = vand.u32 %v1259, 4294901760
    %v1529 = vsub.f32 %v1259, %v1528
    %v1530 = vand.u32 %v1529, 4294901760
    %1531 = vmatpush.msra.mxu0 %v1530
    %v1532 = vand.u32 %v1259, 4294901760
    %v1533 = vsub.f32 %v1259, %v1532
    %v1534 = vand.u32 %v1533, 4294901760
    %1535 = vmatpush.msra.mxu0 %v1534
    %v1536 = vand.u32 %v1259, 4294901760
    %v1537 = vsub.f32 %v1259, %v1536
    %v1538 = vand.u32 %v1537, 4294901760
    %1539 = vmatpush.msra.mxu0 %v1538
    %v1540 = vand.u32 %v1259, 4294901760
    %v1541 = vsub.f32 %v1259, %v1540
    %v1542 = vand.u32 %v1541, 4294901760
    %1543 = vmatpush.msra.mxu0 %v1542
    %v1544 = vand.u32 %v1259, 4294901760
    %v1545 = vsub.f32 %v1259, %v1544
    %v1546 = vand.u32 %v1545, 4294901760
    %1547 = vmatpush.msra.mxu0 %v1546
    %v1548 = vand.u32 %v1259, 4294901760
    %v1549 = vsub.f32 %v1259, %v1548
    %v1550 = vand.u32 %v1549, 4294901760
    %1551 = vmatpush.msra.mxu0 %v1550
    %v1552 = vand.u32 %v1259, 4294901760
    %v1553 = vsub.f32 %v1259, %v1552
    %v1554 = vand.u32 %v1553, 4294901760
    %1555 = vmatpush.msra.mxu0 %v1554
    %v1556 = vand.u32 %v1259, 4294901760
    %v1557 = vsub.f32 %v1259, %v1556
    %v1558 = vand.u32 %v1557, 4294901760
    %1559 = vmatpush.msra.mxu0 %v1558
    %v1560 = vand.u32 %v1260, 4294901760
    %1561 = vmatmul.f32.gmra.mxu0 %v1560
    %v1562 = vpop.f32.mrf.mxu0
    %v1563 = vadd.f32 %v1494, %v1562
    %1564 = vdwg.mxu0
    %v1565 = vand.u32 %v1259, 4294901760
    %1566 = vmatpush.msra.mxu0 %v1565
    %v1567 = vand.u32 %v1259, 4294901760
    %1568 = vmatpush.msra.mxu0 %v1567
    %v1569 = vand.u32 %v1259, 4294901760
    %1570 = vmatpush.msra.mxu0 %v1569
    %v1571 = vand.u32 %v1259, 4294901760
    %1572 = vmatpush.msra.mxu0 %v1571
    %v1573 = vand.u32 %v1259, 4294901760
    %1574 = vmatpush.msra.mxu0 %v1573
    %v1575 = vand.u32 %v1259, 4294901760
    %1576 = vmatpush.msra.mxu0 %v1575
    %v1577 = vand.u32 %v1259, 4294901760
    %1578 = vmatpush.msra.mxu0 %v1577
    %v1579 = vand.u32 %v1259, 4294901760
    %1580 = vmatpush.msra.mxu0 %v1579
    %v1581 = vand.u32 %v1259, 4294901760
    %1582 = vmatpush.msra.mxu0 %v1581
    %v1583 = vand.u32 %v1259, 4294901760
    %1584 = vmatpush.msra.mxu0 %v1583
    %v1585 = vand.u32 %v1259, 4294901760
    %1586 = vmatpush.msra.mxu0 %v1585
    %v1587 = vand.u32 %v1259, 4294901760
    %1588 = vmatpush.msra.mxu0 %v1587
    %v1589 = vand.u32 %v1259, 4294901760
    %1590 = vmatpush.msra.mxu0 %v1589
    %v1591 = vand.u32 %v1259, 4294901760
    %1592 = vmatpush.msra.mxu0 %v1591
    %v1593 = vand.u32 %v1259, 4294901760
    %1594 = vmatpush.msra.mxu0 %v1593
    %v1595 = vand.u32 %v1259, 4294901760
    %1596 = vmatpush.msra.mxu0 %v1595
    %v1597 = vand.u32 %v1260, 4294901760
    %1598 = vmatmul.f32.gmra.mxu0 %v1597
    %v1599 = vpop.f32.mrf.mxu0
    %v1600 = vadd.f32 %v1563, %v1599
    %1601 = vdwg.mxu0
    %v1602 = vadd.f32 %v1254, %v1600
    %v1603 = vrsqrt.pop %v1602
    %v1604 = vmul.f32 %v1603, %v1602
    %v1605 = vmul.f32 %v1604, %v1603
    %v1606 = vmul.f32 0.5, %v1605
    %v1607 = vsub.f32 1.5, %v1606
    %v1608 = vmul.f32 %v1603, %v1607
    %v1609 = vmul.f32 %v1602, %v1608
    %vm1610 = vcmp.eq.f32.partialorder %v1602, inf
    %v1611 = vsel %vm1610, %v1602, %v1609
    %vm1612 = vcmp.eq.f32.partialorder %v1602, 0.0
    %v1613 = vand.u32 %v1602, 2147483648
    %v1614 = vsel %vm1612, %v1613, %v1611
    %v1615 = vsub.f32 0.0, %v1614
    %1616 = vst [vmem:[%s3] sm:$0xff] %v1615
    %1617 = vst [vmem:[#allocation8] sm:$0xff] %v209
    // Predicated region
    $region26: #{mogp_forward.1} parent=1 // pred_check
      _
    $region27: #{mogp_forward.1} parent=1 // pred_check_branch
      %1619 = sbr.rel (0) target = $region29
    $region28: #{mogp_forward.1} parent=1 // pred_region
      _
    $region29: #{mogp_forward.1} parent=1 // pred_fallthru
      _
    // Predicated region
    $region30: #{mogp_forward.1} parent=1 // pred_check
      _
    $region31: #{mogp_forward.1} parent=1 // pred_check_branch
      %1621 = sbr.rel (0) target = $region33
    $region32: #{mogp_forward.1} parent=1 // pred_region
      %1623 = vsyncadd [#allocation4], 0
      %s1625 = sshll.u32 [#allocation8], 4
      %s1626 = int_to_ptr.vmem [resolvable:$true] %s1625
      %s1627 = sshll.u32 %s4, 4
      %s1628 = int_to_ptr.hbm [resolvable:$true] %s1627
      %1630 = dma.vmem_to_hbm [thread:$0]  %s1626, 128, %s1628, [#allocation4]
    $region33: #{mogp_forward.1} parent=1 // pred_fallthru
      _
    // Predicated region
    $region34: #{mogp_forward.1} parent=1 // pred_check
      _
    $region35: #{mogp_forward.1} parent=1 // pred_check_branch
      %1632 = sbr.rel (0) target = $region37
    $region36: #{mogp_forward.1} parent=1 // pred_region
      _
    $region37: #{mogp_forward.1} parent=1 // pred_fallthru
      _
    // Predicated region
    $region38: #{mogp_forward.1} parent=1 // pred_check
      _
    $region39: #{mogp_forward.1} parent=1 // pred_check_branch
      %1634 = sbr.rel (0) target = $region41
    $region40: #{mogp_forward.1} parent=1 // pred_region
      %1636 = dma.done [#allocation4], 128
    $region41: #{mogp_forward.1} parent=1 // pred_fallthru
      _
    %1637 = vsyncpa [#allocation3], 1
    %1638 = vsyncpa [#allocation6], 1
    %1639 = vsyncpa [#allocation4], 1

</llo_original>
